<compile_context>
chip_gen: v6e
topology: v6e:2x2x1
jax: 0.10.0
libtpu: 0.0.40
codegen_flags: <defaults>
</compile_context>

<pallas_src>
import functools

import jax
import jax.numpy as jnp
from jax.experimental import pallas as pl
from jax.experimental.pallas import tpu as pltpu

EDGE_UNROLL = 8   # edges processed per statically-unrolled chunk


def gnn_forward_kernel(src_ref, dst_ref,                       # SMEM (scalar prefetch)
                       h0_ref, eemb_ref,
                       w1_ref, s1_ref, t1_ref,
                       w2_ref, s2_ref, t2_ref,
                       pool_ref, out_ref,
                       h_scr, aggr_scr,
                       *, num_layer, num_edges, eps_gin):
    """One GIN layer per grid step; h carried in VMEM scratch; pool at the last step.

    src/dst : (E,) int32 SMEM edge endpoints
    h0      : (N, D)  initial node embeddings (AtomEncoder output)
    eemb    : (E, D)  this layer's BondEncoder edge embeddings (streamed)
    w1/s1/t1: GIN MLP first Linear (bf16) + folded eval-BN affine (bias folded in t1)
    w2/s2/t2: GIN MLP second Linear (bf16) + outer eval-BN affine (bias folded in t2)
    pool    : (G, N)  mean-pool matrix (1/|V_g| at members of graph g)
    out     : (G, D)  pooled graph representations (written at last layer)
    """
    l = pl.program_id(0)

    # Layer 0: initialize persistent node state from the atom embeddings.
    @pl.when(l == 0)
    def _():
        h_scr[...] = h0_ref[...]

    # ---- GINConv: seed (1+eps)*h into the aggregation buffer, then scatter-add ----
    aggr_scr[...] = (1.0 + eps_gin) * h_scr[...]

    num_chunks = num_edges // EDGE_UNROLL

    def chunk_body(c, carry):
        base = c * EDGE_UNROLL
        for j in range(EDGE_UNROLL):          # statically unrolled -> ILP for scheduler
            e = base + j
            s = src_ref[e]
            d = dst_ref[e]
            msg = jnp.maximum(h_scr[pl.ds(s, 1), :] + eemb_ref[pl.ds(e, 1), :], 0.0)
            aggr_scr[pl.ds(d, 1), :] = aggr_scr[pl.ds(d, 1), :] + msg
        return carry

    jax.lax.fori_loop(0, num_chunks, chunk_body, 0)

    z = aggr_scr[...]                                                   # (N, D) f32

    # ---- GIN MLP: Linear(D,2D) -> BN(eval) -> ReLU -> Linear(2D,D) (bf16 MXU, f32 acc)
    u = jnp.dot(z.astype(jnp.bfloat16), w1_ref[...],
                preferred_element_type=jnp.float32)
    u = jnp.maximum(u * s1_ref[...] + t1_ref[...], 0.0)
    y = jnp.dot(u.astype(jnp.bfloat16), w2_ref[...],
                preferred_element_type=jnp.float32)

    # ---- per-layer outer BatchNorm (eval, affine-folded incl. bias) ---------------
    h_new = y * s2_ref[...] + t2_ref[...]

    @pl.when(l < num_layer - 1)
    def _():
        h_scr[...] = jnp.maximum(h_new, 0.0)   # ReLU + identity dropout (eval mode)

    # ---- last layer: no ReLU; global mean pool (JK='last') ------------------------
    @pl.when(l == num_layer - 1)
    def _():
        out_ref[...] = jnp.dot(pool_ref[...], h_new,
                               preferred_element_type=jnp.float32)


def gnn_forward(edge_src, edge_dst, h0, eemb, W1, s1, t1, W2, s2, t2,
                pool_mat, *, num_layer, num_edges, eps_gin=0.0):
    N, D = h0.shape
    E = eemb.shape[1]
    H = W1.shape[2]
    G = pool_mat.shape[0]
    assert num_edges % EDGE_UNROLL == 0, "pad edge list to a multiple of EDGE_UNROLL"

    kernel = functools.partial(gnn_forward_kernel, num_layer=num_layer,
                               num_edges=num_edges, eps_gin=eps_gin)

    def per_layer(l, *_):      # index_maps also receive the scalar-prefetch refs
        return (l, 0, 0)

    def whole(l, *_):
        return (0, 0)

    grid_spec = pltpu.PrefetchScalarGridSpec(
        num_scalar_prefetch=2,                 # edge_src, edge_dst -> SMEM
        grid=(num_layer,),
        in_specs=[
            pl.BlockSpec((N, D), whole),             # h0 (used only at layer 0)
            pl.BlockSpec((None, E, D), per_layer),   # per-layer edge embeddings
            pl.BlockSpec((None, D, H), per_layer),   # W1 (bf16)
            pl.BlockSpec((None, 1, H), per_layer),   # s1 (folded BN scale)
            pl.BlockSpec((None, 1, H), per_layer),   # t1 (folded BN shift + bias)
            pl.BlockSpec((None, H, D), per_layer),   # W2 (bf16)
            pl.BlockSpec((None, 1, D), per_layer),   # s2
            pl.BlockSpec((None, 1, D), per_layer),   # t2 (folded shift + bias)
            pl.BlockSpec((G, N), whole),             # mean-pool matrix
        ],
        out_specs=pl.BlockSpec((G, D), whole),
        scratch_shapes=[pltpu.VMEM((N, D), jnp.float32),    # node state h (persistent)
                        pltpu.VMEM((N, D), jnp.float32)],   # per-layer aggregation
    )
    return pl.pallas_call(
        kernel,
        out_shape=jax.ShapeDtypeStruct((G, D), jnp.float32),
        grid_spec=grid_spec,
        compiler_params=pltpu.CompilerParams(
            dimension_semantics=("arbitrary",),          # h carries across layers
            vmem_limit_bytes=32 * 1024 * 1024),
    )(edge_src, edge_dst, h0, eemb, W1, s1, t1, W2, s2, t2, pool_mat)


if __name__ == "__main__":
    # ---- small, deterministic, lane/MXU-aligned synthetic problem --------------
    G = 8                          # graphs in the batch (sublane-aligned output)
    NPG, EPG = 16, 32              # nodes / edges per graph
    N, E = G * NPG, G * EPG        # 128 nodes, 256 edges
    D, L = 128, 3                  # emb_dim padded to lane width; num_layer
    H = 2 * D                      # GIN MLP hidden width
    ATOM_DIMS = [119, 5, 12, 12, 10, 6, 6, 2, 2]   # OGB atom feature vocab sizes
    BOND_DIMS = [5, 6, 2]                          # OGB bond feature vocab sizes
    BN_EPS = 1e-5
    EPS_GIN = 0.0                  # GINConv eps parameter (init value)

    key = jax.random.PRNGKey(0)
    keys = iter(jax.random.split(key, 128))

    def init(shape, scale=0.1):
        return (scale * jax.random.normal(next(keys), shape)).astype(jnp.float32)

    # batched graph: graph g owns nodes [g*NPG, (g+1)*NPG), EPG intra-graph edges
    batch = jnp.repeat(jnp.arange(G, dtype=jnp.int32), NPG)
    srcs, dsts = [], []
    for g in range(G):
        srcs.append(jax.random.randint(next(keys), (EPG,), 0, NPG) + g * NPG)
        dsts.append(jax.random.randint(next(keys), (EPG,), 0, NPG) + g * NPG)
    edge_src = jnp.concatenate(srcs).astype(jnp.int32)
    edge_dst = jnp.concatenate(dsts).astype(jnp.int32)
    node_x = jnp.stack([jax.random.randint(next(keys), (N,), 0, v)
                        for v in ATOM_DIMS], axis=1)
    edge_attr = jnp.stack([jax.random.randint(next(keys), (E,), 0, v)
                           for v in BOND_DIMS], axis=1)

    # ---- deterministic parameters (shapes per module __init__) -----------------
    atom_tables = [init((v, D)) for v in ATOM_DIMS]                        # AtomEncoder
    bond_tables = [[init((v, D)) for v in BOND_DIMS] for _ in range(L)]    # BondEncoder
    W1 = jnp.stack([init((D, H)) for _ in range(L)])
    b1 = jnp.stack([init((1, H)) for _ in range(L)])
    g1 = jnp.stack([1.0 + init((1, H)) for _ in range(L)])                 # MLP-BN gamma
    be1 = jnp.stack([init((1, H)) for _ in range(L)])                      # MLP-BN beta
    W2 = jnp.stack([init((H, D)) for _ in range(L)])
    b2 = jnp.stack([init((1, D)) for _ in range(L)])
    g2 = jnp.stack([1.0 + init((1, D)) for _ in range(L)])                 # outer-BN gamma
    be2 = jnp.stack([init((1, D)) for _ in range(L)])                      # outer-BN beta
    # eval-mode BatchNorm with running_mean=0, running_var=1 -> affine fold
    s1, t1 = g1 / jnp.sqrt(1.0 + BN_EPS), be1
    s2, t2 = g2 / jnp.sqrt(1.0 + BN_EPS), be2
    # fold the Linear biases into the affine shifts (exact in infinite precision)
    t1_fold = b1 * s1 + t1
    t2_fold = b2 * s2 + t2
    # TODO(synk): training-mode BN (batch statistics) and dropout RNG are not modeled.

    # ---- JAX glue: AtomEncoder / BondEncoder embedding lookups, pool matrix ----
    h0 = sum(atom_tables[j][node_x[:, j]] for j in range(len(ATOM_DIMS)))
    h0 = h0.astype(jnp.float32)                                            # (N, D)
    eemb = jnp.stack([sum(bond_tables[l][j][edge_attr[:, j]]
                          for j in range(len(BOND_DIMS)))
                      for l in range(L)]).astype(jnp.float32)              # (L, E, D)
    counts = jnp.bincount(batch, length=G).astype(jnp.float32)             # (G,)
    pool_mat = (jax.nn.one_hot(batch, G, dtype=jnp.float32).T
                / counts[:, None]).astype(jnp.float32)                     # (G, N)

    # bf16 MXU operands (accumulation stays f32 inside the kernel)
    W1_bf = W1.astype(jnp.bfloat16)
    W2_bf = W2.astype(jnp.bfloat16)

    # ---- run kernel -------------------------------------------------------------
    h_graph = gnn_forward(edge_src, edge_dst, h0, eemb,
                          W1_bf, s1, t1_fold, W2_bf, s2, t2_fold, pool_mat,
                          num_layer=L, num_edges=E, eps_gin=EPS_GIN)
    h_graph = jax.block_until_ready(h_graph)

    # ---- pure-JAX reference (mirrors the kernel's bf16 matmul-operand rounding) --
    def bf16(x):
        return x.astype(jnp.bfloat16).astype(jnp.float32)

    def reference(h):
        for l in range(L):
            msg = jnp.maximum(h[edge_src] + eemb[l], 0.0)
            aggr = jnp.zeros_like(h).at[edge_dst].add(msg)
            z = (1.0 + EPS_GIN) * h + aggr
            u = jnp.maximum((bf16(z) @ bf16(W1[l]) + b1[l]) * s1[l] + t1[l], 0.0)
            hn = (bf16(u) @ bf16(W2[l]) + b2[l]) * s2[l] + t2[l]
            if l != L - 1:
                hn = jnp.maximum(hn, 0.0)
            h = hn
        pooled = jnp.zeros((G, D), jnp.float32).at[batch].add(h)
        return pooled / counts[:, None]

    ref = jax.block_until_ready(reference(h0))
    assert h_graph.shape == (G, D)
    assert jnp.allclose(h_graph, ref, atol=2e-2, rtol=2e-2), \
        float(jnp.max(jnp.abs(h_graph - ref)))
    print("KERNEL_OK")
</pallas_src>

<mosaic_0001>
module attributes {stable_mosaic.version = 11 : i64} {
  func.func @gnn_forward_kernel(%arg0: i32, %arg1: memref<256xi32, #tpu.memory_space<smem>>, %arg2: memref<256xi32, #tpu.memory_space<smem>>, %arg3: memref<128x128xf32, #tpu.memory_space<vmem>>, %arg4: memref<1x256x128xf32, #tpu.memory_space<vmem>>, %arg5: memref<1x128x256xbf16, #tpu.memory_space<vmem>>, %arg6: memref<1x1x256xf32, #tpu.memory_space<vmem>>, %arg7: memref<1x1x256xf32, #tpu.memory_space<vmem>>, %arg8: memref<1x256x128xbf16, #tpu.memory_space<vmem>>, %arg9: memref<1x1x128xf32, #tpu.memory_space<vmem>>, %arg10: memref<1x1x128xf32, #tpu.memory_space<vmem>>, %arg11: memref<8x128xf32, #tpu.memory_space<vmem>>, %arg12: memref<8x128xf32, #tpu.memory_space<vmem>>, %arg13: memref<128x128xf32, #tpu.memory_space<vmem>>, %arg14: memref<128x128xf32, #tpu.memory_space<vmem>>) attributes {dimension_semantics = [#tpu.dimension_semantics<arbitrary>], iteration_bounds = array<i64: 3>, scalar_prefetch = 2 : i64, scratch_operands = 2 : i64, tpu.core_type = #tpu.core_type<tc>, window_params = [{pipeline_mode = #tpu.pipeline_mode<synchronous>, transform_indices = @transform_0, window_bounds = array<i64: 128, 128>}, {transform_indices = @transform_1, window_bounds = array<i64: 1, 256, 128>}, {transform_indices = @transform_2, window_bounds = array<i64: 1, 128, 256>}, {transform_indices = @transform_3, window_bounds = array<i64: 1, 1, 256>}, {transform_indices = @transform_4, window_bounds = array<i64: 1, 1, 256>}, {transform_indices = @transform_5, window_bounds = array<i64: 1, 256, 128>}, {transform_indices = @transform_6, window_bounds = array<i64: 1, 1, 128>}, {transform_indices = @transform_7, window_bounds = array<i64: 1, 1, 128>}, {pipeline_mode = #tpu.pipeline_mode<synchronous>, transform_indices = @transform_8, window_bounds = array<i64: 8, 128>}, {pipeline_mode = #tpu.pipeline_mode<synchronous>, transform_indices = @transform_9, window_bounds = array<i64: 8, 128>}]} {
    %c0_i32 = arith.constant 0 : i32
    %0 = arith.cmpi eq, %arg0, %c0_i32 : i32
    %1 = arith.extui %0 : i1 to i32
    %c0_i32_0 = arith.constant 0 : i32
    %2 = arith.cmpi ne, %1, %c0_i32_0 : i32
    scf.if %2 {
      %c0_32 = arith.constant 0 : index
      %c0_33 = arith.constant 0 : index
      %41 = vector.load %arg3[%c0_32, %c0_33] : memref<128x128xf32, #tpu.memory_space<vmem>>, vector<128x128xf32>
      %c0_34 = arith.constant 0 : index
      %c0_35 = arith.constant 0 : index
      %42 = vector.load %arg13[%c0_34, %c0_35] : memref<128x128xf32, #tpu.memory_space<vmem>>, vector<128x128xf32>
      tpu.vector_store %arg13[%c0_34, %c0_35], %41 {strides = array<i32>} : memref<128x128xf32, #tpu.memory_space<vmem>>, vector<128x128xf32>,
    } else {
    }
    %c0 = arith.constant 0 : index
    %c0_1 = arith.constant 0 : index
    %3 = vector.load %arg13[%c0, %c0_1] : memref<128x128xf32, #tpu.memory_space<vmem>>, vector<128x128xf32>
    %cst = arith.constant 1.000000e+00 : f32
    %4 = vector.broadcast %cst : f32 to vector<128x128xf32>
    %5 = arith.mulf %4, %3 : vector<128x128xf32>
    %c0_2 = arith.constant 0 : index
    %c0_3 = arith.constant 0 : index
    %6 = vector.load %arg14[%c0_2, %c0_3] : memref<128x128xf32, #tpu.memory_space<vmem>>, vector<128x128xf32>
    tpu.vector_store %arg14[%c0_2, %c0_3], %5 {strides = array<i32>} : memref<128x128xf32, #tpu.memory_space<vmem>>, vector<128x128xf32>,
    %c0_i32_4 = arith.constant 0 : i32
    %c32_i32 = arith.constant 32 : i32
    %7 = arith.addi %c0_i32_4, %c32_i32 : i32
    %c1_i32 = arith.constant 1 : i32
    scf.for %arg15 = %c0_i32_4 to %7 step %c1_i32  : i32 {
      %c8_i32 = arith.constant 8 : i32
      %41 = arith.muli %arg15, %c8_i32 : i32
      %c0_i32_32 = arith.constant 0 : i32
      %42 = arith.addi %41, %c0_i32_32 : i32
      %43 = arith.index_cast %42 : i32 to index
      %44 = memref.load %arg1[%43] : memref<256xi32, #tpu.memory_space<smem>>
      %45 = arith.index_cast %42 : i32 to index
      %46 = memref.load %arg2[%45] : memref<256xi32, #tpu.memory_space<smem>>
      %47 = arith.index_cast %44 : i32 to index
      %c0_33 = arith.constant 0 : index
      %48 = vector.load %arg13[%47, %c0_33] : memref<128x128xf32, #tpu.memory_space<vmem>>, vector<1x128xf32>
      %c0_34 = arith.constant 0 : index
      %49 = arith.index_cast %42 : i32 to index
      %c0_35 = arith.constant 0 : index
      %50 = vector.load %arg4[%c0_34, %49, %c0_35] : memref<1x256x128xf32, #tpu.memory_space<vmem>>, vector<1x1x128xf32>
      %51 = vector.shape_cast %50 : vector<1x1x128xf32> to vector<1x128xf32>
      %52 = arith.addf %48, %51 : vector<1x128xf32>
      %cst_36 = arith.constant 0.000000e+00 : f32
      %53 = vector.broadcast %cst_36 : f32 to vector<1x128xf32>
      %54 = arith.maximumf %52, %53 : vector<1x128xf32>
      %55 = arith.index_cast %46 : i32 to index
      %c0_37 = arith.constant 0 : index
      %56 = vector.load %arg14[%55, %c0_37] : memref<128x128xf32, #tpu.memory_space<vmem>>, vector<1x128xf32>
      %57 = arith.addf %56, %54 : vector<1x128xf32>
      %58 = arith.index_cast %46 : i32 to index
      %c0_38 = arith.constant 0 : index
      %59 = vector.load %arg14[%58, %c0_38] : memref<128x128xf32, #tpu.memory_space<vmem>>, vector<1x128xf32>
      tpu.vector_store %arg14[%58, %c0_38], %57 {strides = array<i32>} : memref<128x128xf32, #tpu.memory_space<vmem>>, vector<1x128xf32>,
      %c1_i32_39 = arith.constant 1 : i32
      %60 = arith.addi %41, %c1_i32_39 : i32
      %61 = arith.index_cast %60 : i32 to index
      %62 = memref.load %arg1[%61] : memref<256xi32, #tpu.memory_space<smem>>
      %63 = arith.index_cast %60 : i32 to index
      %64 = memref.load %arg2[%63] : memref<256xi32, #tpu.memory_space<smem>>
      %65 = arith.index_cast %62 : i32 to index
      %c0_40 = arith.constant 0 : index
      %66 = vector.load %arg13[%65, %c0_40] : memref<128x128xf32, #tpu.memory_space<vmem>>, vector<1x128xf32>
      %c0_41 = arith.constant 0 : index
      %67 = arith.index_cast %60 : i32 to index
      %c0_42 = arith.constant 0 : index
      %68 = vector.load %arg4[%c0_41, %67, %c0_42] : memref<1x256x128xf32, #tpu.memory_space<vmem>>, vector<1x1x128xf32>
      %69 = vector.shape_cast %68 : vector<1x1x128xf32> to vector<1x128xf32>
      %70 = arith.addf %66, %69 : vector<1x128xf32>
      %cst_43 = arith.constant 0.000000e+00 : f32
      %71 = vector.broadcast %cst_43 : f32 to vector<1x128xf32>
      %72 = arith.maximumf %70, %71 : vector<1x128xf32>
      %73 = arith.index_cast %64 : i32 to index
      %c0_44 = arith.constant 0 : index
      %74 = vector.load %arg14[%73, %c0_44] : memref<128x128xf32, #tpu.memory_space<vmem>>, vector<1x128xf32>
      %75 = arith.addf %74, %72 : vector<1x128xf32>
      %76 = arith.index_cast %64 : i32 to index
      %c0_45 = arith.constant 0 : index
      %77 = vector.load %arg14[%76, %c0_45] : memref<128x128xf32, #tpu.memory_space<vmem>>, vector<1x128xf32>
      tpu.vector_store %arg14[%76, %c0_45], %75 {strides = array<i32>} : memref<128x128xf32, #tpu.memory_space<vmem>>, vector<1x128xf32>,
      %c2_i32_46 = arith.constant 2 : i32
      %78 = arith.addi %41, %c2_i32_46 : i32
      %79 = arith.index_cast %78 : i32 to index
      %80 = memref.load %arg1[%79] : memref<256xi32, #tpu.memory_space<smem>>
      %81 = arith.index_cast %78 : i32 to index
      %82 = memref.load %arg2[%81] : memref<256xi32, #tpu.memory_space<smem>>
      %83 = arith.index_cast %80 : i32 to index
      %c0_47 = arith.constant 0 : index
      %84 = vector.load %arg13[%83, %c0_47] : memref<128x128xf32, #tpu.memory_space<vmem>>, vector<1x128xf32>
      %c0_48 = arith.constant 0 : index
      %85 = arith.index_cast %78 : i32 to index
      %c0_49 = arith.constant 0 : index
      %86 = vector.load %arg4[%c0_48, %85, %c0_49] : memref<1x256x128xf32, #tpu.memory_space<vmem>>, vector<1x1x128xf32>
      %87 = vector.shape_cast %86 : vector<1x1x128xf32> to vector<1x128xf32>
      %88 = arith.addf %84, %87 : vector<1x128xf32>
      %cst_50 = arith.constant 0.000000e+00 : f32
      %89 = vector.broadcast %cst_50 : f32 to vector<1x128xf32>
      %90 = arith.maximumf %88, %89 : vector<1x128xf32>
      %91 = arith.index_cast %82 : i32 to index
      %c0_51 = arith.constant 0 : index
      %92 = vector.load %arg14[%91, %c0_51] : memref<128x128xf32, #tpu.memory_space<vmem>>, vector<1x128xf32>
      %93 = arith.addf %92, %90 : vector<1x128xf32>
      %94 = arith.index_cast %82 : i32 to index
      %c0_52 = arith.constant 0 : index
      %95 = vector.load %arg14[%94, %c0_52] : memref<128x128xf32, #tpu.memory_space<vmem>>, vector<1x128xf32>
      tpu.vector_store %arg14[%94, %c0_52], %93 {strides = array<i32>} : memref<128x128xf32, #tpu.memory_space<vmem>>, vector<1x128xf32>,
      %c3_i32 = arith.constant 3 : i32
      %96 = arith.addi %41, %c3_i32 : i32
      %97 = arith.index_cast %96 : i32 to index
      %98 = memref.load %arg1[%97] : memref<256xi32, #tpu.memory_space<smem>>
      %99 = arith.index_cast %96 : i32 to index
      %100 = memref.load %arg2[%99] : memref<256xi32, #tpu.memory_space<smem>>
      %101 = arith.index_cast %98 : i32 to index
      %c0_53 = arith.constant 0 : index
      %102 = vector.load %arg13[%101, %c0_53] : memref<128x128xf32, #tpu.memory_space<vmem>>, vector<1x128xf32>
      %c0_54 = arith.constant 0 : index
      %103 = arith.index_cast %96 : i32 to index
      %c0_55 = arith.constant 0 : index
      %104 = vector.load %arg4[%c0_54, %103, %c0_55] : memref<1x256x128xf32, #tpu.memory_space<vmem>>, vector<1x1x128xf32>
      %105 = vector.shape_cast %104 : vector<1x1x128xf32> to vector<1x128xf32>
      %106 = arith.addf %102, %105 : vector<1x128xf32>
      %cst_56 = arith.constant 0.000000e+00 : f32
      %107 = vector.broadcast %cst_56 : f32 to vector<1x128xf32>
      %108 = arith.maximumf %106, %107 : vector<1x128xf32>
      %109 = arith.index_cast %100 : i32 to index
      %c0_57 = arith.constant 0 : index
      %110 = vector.load %arg14[%109, %c0_57] : memref<128x128xf32, #tpu.memory_space<vmem>>, vector<1x128xf32>
      %111 = arith.addf %110, %108 : vector<1x128xf32>
      %112 = arith.index_cast %100 : i32 to index
      %c0_58 = arith.constant 0 : index
      %113 = vector.load %arg14[%112, %c0_58] : memref<128x128xf32, #tpu.memory_space<vmem>>, vector<1x128xf32>
      tpu.vector_store %arg14[%112, %c0_58], %111 {strides = array<i32>} : memref<128x128xf32, #tpu.memory_space<vmem>>, vector<1x128xf32>,
      %c4_i32 = arith.constant 4 : i32
      %114 = arith.addi %41, %c4_i32 : i32
      %115 = arith.index_cast %114 : i32 to index
      %116 = memref.load %arg1[%115] : memref<256xi32, #tpu.memory_space<smem>>
      %117 = arith.index_cast %114 : i32 to index
      %118 = memref.load %arg2[%117] : memref<256xi32, #tpu.memory_space<smem>>
      %119 = arith.index_cast %116 : i32 to index
      %c0_59 = arith.constant 0 : index
      %120 = vector.load %arg13[%119, %c0_59] : memref<128x128xf32, #tpu.memory_space<vmem>>, vector<1x128xf32>
      %c0_60 = arith.constant 0 : index
      %121 = arith.index_cast %114 : i32 to index
      %c0_61 = arith.constant 0 : index
      %122 = vector.load %arg4[%c0_60, %121, %c0_61] : memref<1x256x128xf32, #tpu.memory_space<vmem>>, vector<1x1x128xf32>
      %123 = vector.shape_cast %122 : vector<1x1x128xf32> to vector<1x128xf32>
      %124 = arith.addf %120, %123 : vector<1x128xf32>
      %cst_62 = arith.constant 0.000000e+00 : f32
      %125 = vector.broadcast %cst_62 : f32 to vector<1x128xf32>
      %126 = arith.maximumf %124, %125 : vector<1x128xf32>
      %127 = arith.index_cast %118 : i32 to index
      %c0_63 = arith.constant 0 : index
      %128 = vector.load %arg14[%127, %c0_63] : memref<128x128xf32, #tpu.memory_space<vmem>>, vector<1x128xf32>
      %129 = arith.addf %128, %126 : vector<1x128xf32>
      %130 = arith.index_cast %118 : i32 to index
      %c0_64 = arith.constant 0 : index
      %131 = vector.load %arg14[%130, %c0_64] : memref<128x128xf32, #tpu.memory_space<vmem>>, vector<1x128xf32>
      tpu.vector_store %arg14[%130, %c0_64], %129 {strides = array<i32>} : memref<128x128xf32, #tpu.memory_space<vmem>>, vector<1x128xf32>,
      %c5_i32 = arith.constant 5 : i32
      %132 = arith.addi %41, %c5_i32 : i32
      %133 = arith.index_cast %132 : i32 to index
      %134 = memref.load %arg1[%133] : memref<256xi32, #tpu.memory_space<smem>>
      %135 = arith.index_cast %132 : i32 to index
      %136 = memref.load %arg2[%135] : memref<256xi32, #tpu.memory_space<smem>>
      %137 = arith.index_cast %134 : i32 to index
      %c0_65 = arith.constant 0 : index
      %138 = vector.load %arg13[%137, %c0_65] : memref<128x128xf32, #tpu.memory_space<vmem>>, vector<1x128xf32>
      %c0_66 = arith.constant 0 : index
      %139 = arith.index_cast %132 : i32 to index
      %c0_67 = arith.constant 0 : index
      %140 = vector.load %arg4[%c0_66, %139, %c0_67] : memref<1x256x128xf32, #tpu.memory_space<vmem>>, vector<1x1x128xf32>
      %141 = vector.shape_cast %140 : vector<1x1x128xf32> to vector<1x128xf32>
      %142 = arith.addf %138, %141 : vector<1x128xf32>
      %cst_68 = arith.constant 0.000000e+00 : f32
      %143 = vector.broadcast %cst_68 : f32 to vector<1x128xf32>
      %144 = arith.maximumf %142, %143 : vector<1x128xf32>
      %145 = arith.index_cast %136 : i32 to index
      %c0_69 = arith.constant 0 : index
      %146 = vector.load %arg14[%145, %c0_69] : memref<128x128xf32, #tpu.memory_space<vmem>>, vector<1x128xf32>
      %147 = arith.addf %146, %144 : vector<1x128xf32>
      %148 = arith.index_cast %136 : i32 to index
      %c0_70 = arith.constant 0 : index
      %149 = vector.load %arg14[%148, %c0_70] : memref<128x128xf32, #tpu.memory_space<vmem>>, vector<1x128xf32>
      tpu.vector_store %arg14[%148, %c0_70], %147 {strides = array<i32>} : memref<128x128xf32, #tpu.memory_space<vmem>>, vector<1x128xf32>,
      %c6_i32 = arith.constant 6 : i32
      %150 = arith.addi %41, %c6_i32 : i32
      %151 = arith.index_cast %150 : i32 to index
      %152 = memref.load %arg1[%151] : memref<256xi32, #tpu.memory_space<smem>>
      %153 = arith.index_cast %150 : i32 to index
      %154 = memref.load %arg2[%153] : memref<256xi32, #tpu.memory_space<smem>>
      %155 = arith.index_cast %152 : i32 to index
      %c0_71 = arith.constant 0 : index
      %156 = vector.load %arg13[%155, %c0_71] : memref<128x128xf32, #tpu.memory_space<vmem>>, vector<1x128xf32>
      %c0_72 = arith.constant 0 : index
      %157 = arith.index_cast %150 : i32 to index
      %c0_73 = arith.constant 0 : index
      %158 = vector.load %arg4[%c0_72, %157, %c0_73] : memref<1x256x128xf32, #tpu.memory_space<vmem>>, vector<1x1x128xf32>
      %159 = vector.shape_cast %158 : vector<1x1x128xf32> to vector<1x128xf32>
      %160 = arith.addf %156, %159 : vector<1x128xf32>
      %cst_74 = arith.constant 0.000000e+00 : f32
      %161 = vector.broadcast %cst_74 : f32 to vector<1x128xf32>
      %162 = arith.maximumf %160, %161 : vector<1x128xf32>
      %163 = arith.index_cast %154 : i32 to index
      %c0_75 = arith.constant 0 : index
      %164 = vector.load %arg14[%163, %c0_75] : memref<128x128xf32, #tpu.memory_space<vmem>>, vector<1x128xf32>
      %165 = arith.addf %164, %162 : vector<1x128xf32>
      %166 = arith.index_cast %154 : i32 to index
      %c0_76 = arith.constant 0 : index
      %167 = vector.load %arg14[%166, %c0_76] : memref<128x128xf32, #tpu.memory_space<vmem>>, vector<1x128xf32>
      tpu.vector_store %arg14[%166, %c0_76], %165 {strides = array<i32>} : memref<128x128xf32, #tpu.memory_space<vmem>>, vector<1x128xf32>,
      %c7_i32 = arith.constant 7 : i32
      %168 = arith.addi %41, %c7_i32 : i32
      %169 = arith.index_cast %168 : i32 to index
      %170 = memref.load %arg1[%169] : memref<256xi32, #tpu.memory_space<smem>>
      %171 = arith.index_cast %168 : i32 to index
      %172 = memref.load %arg2[%171] : memref<256xi32, #tpu.memory_space<smem>>
      %173 = arith.index_cast %170 : i32 to index
      %c0_77 = arith.constant 0 : index
      %174 = vector.load %arg13[%173, %c0_77] : memref<128x128xf32, #tpu.memory_space<vmem>>, vector<1x128xf32>
      %c0_78 = arith.constant 0 : index
      %175 = arith.index_cast %168 : i32 to index
      %c0_79 = arith.constant 0 : index
      %176 = vector.load %arg4[%c0_78, %175, %c0_79] : memref<1x256x128xf32, #tpu.memory_space<vmem>>, vector<1x1x128xf32>
      %177 = vector.shape_cast %176 : vector<1x1x128xf32> to vector<1x128xf32>
      %178 = arith.addf %174, %177 : vector<1x128xf32>
      %cst_80 = arith.constant 0.000000e+00 : f32
      %179 = vector.broadcast %cst_80 : f32 to vector<1x128xf32>
      %180 = arith.maximumf %178, %179 : vector<1x128xf32>
      %181 = arith.index_cast %172 : i32 to index
      %c0_81 = arith.constant 0 : index
      %182 = vector.load %arg14[%181, %c0_81] : memref<128x128xf32, #tpu.memory_space<vmem>>, vector<1x128xf32>
      %183 = arith.addf %182, %180 : vector<1x128xf32>
      %184 = arith.index_cast %172 : i32 to index
      %c0_82 = arith.constant 0 : index
      %185 = vector.load %arg14[%184, %c0_82] : memref<128x128xf32, #tpu.memory_space<vmem>>, vector<1x128xf32>
      tpu.vector_store %arg14[%184, %c0_82], %183 {strides = array<i32>} : memref<128x128xf32, #tpu.memory_space<vmem>>, vector<1x128xf32>,
    }
    %c32_i32_5 = arith.constant 32 : i32
    %c0_6 = arith.constant 0 : index
    %c0_7 = arith.constant 0 : index
    %8 = vector.load %arg14[%c0_6, %c0_7] : memref<128x128xf32, #tpu.memory_space<vmem>>, vector<128x128xf32>
    %9 = arith.truncf %8 : vector<128x128xf32> to vector<128x128xbf16>
    %c0_8 = arith.constant 0 : index
    %c0_9 = arith.constant 0 : index
    %c0_10 = arith.constant 0 : index
    %10 = vector.load %arg5[%c0_8, %c0_9, %c0_10] : memref<1x128x256xbf16, #tpu.memory_space<vmem>>, vector<1x128x256xbf16>
    %11 = vector.shape_cast %10 : vector<1x128x256xbf16> to vector<128x256xbf16>
    %cst_11 = arith.constant dense<0.000000e+00> : vector<128x256xf32>
    %12 = tpu.matmul %9, %11, %cst_11 {dimension_numbers = #tpu.dot_dimension_numbers<[1], [0], [0], [1], [0, 0, 1, 1], [], []>} : vector<128x128xbf16>, vector<128x256xbf16>, vector<128x256xf32> -> vector<128x256xf32>
    %c0_12 = arith.constant 0 : index
    %c0_13 = arith.constant 0 : index
    %c0_14 = arith.constant 0 : index
    %13 = vector.load %arg6[%c0_12, %c0_13, %c0_14] : memref<1x1x256xf32, #tpu.memory_space<vmem>>, vector<1x1x256xf32>
    %14 = vector.shape_cast %13 : vector<1x1x256xf32> to vector<1x256xf32>
    %15 = vector.broadcast %14 : vector<1x256xf32> to vector<128x256xf32>
    %16 = arith.mulf %12, %15 : vector<128x256xf32>
    %c0_15 = arith.constant 0 : index
    %c0_16 = arith.constant 0 : index
    %c0_17 = arith.constant 0 : index
    %17 = vector.load %arg7[%c0_15, %c0_16, %c0_17] : memref<1x1x256xf32, #tpu.memory_space<vmem>>, vector<1x1x256xf32>
    %18 = vector.shape_cast %17 : vector<1x1x256xf32> to vector<1x256xf32>
    %19 = vector.broadcast %18 : vector<1x256xf32> to vector<128x256xf32>
    %20 = arith.addf %16, %19 : vector<128x256xf32>
    %cst_18 = arith.constant 0.000000e+00 : f32
    %21 = vector.broadcast %cst_18 : f32 to vector<128x256xf32>
    %22 = arith.maximumf %20, %21 : vector<128x256xf32>
    %23 = arith.truncf %22 : vector<128x256xf32> to vector<128x256xbf16>
    %c0_19 = arith.constant 0 : index
    %c0_20 = arith.constant 0 : index
    %c0_21 = arith.constant 0 : index
    %24 = vector.load %arg8[%c0_19, %c0_20, %c0_21] : memref<1x256x128xbf16, #tpu.memory_space<vmem>>, vector<1x256x128xbf16>
    %25 = vector.shape_cast %24 : vector<1x256x128xbf16> to vector<256x128xbf16>
    %cst_22 = arith.constant dense<0.000000e+00> : vector<128x128xf32>
    %26 = tpu.matmul %23, %25, %cst_22 {dimension_numbers = #tpu.dot_dimension_numbers<[1], [0], [0], [1], [0, 0, 1, 1], [], []>} : vector<128x256xbf16>, vector<256x128xbf16>, vector<128x128xf32> -> vector<128x128xf32>
    %c0_23 = arith.constant 0 : index
    %c0_24 = arith.constant 0 : index
    %c0_25 = arith.constant 0 : index
    %27 = vector.load %arg9[%c0_23, %c0_24, %c0_25] : memref<1x1x128xf32, #tpu.memory_space<vmem>>, vector<1x1x128xf32>
    %28 = vector.shape_cast %27 : vector<1x1x128xf32> to vector<1x128xf32>
    %29 = vector.broadcast %28 : vector<1x128xf32> to vector<128x128xf32>
    %30 = arith.mulf %26, %29 : vector<128x128xf32>
    %c0_26 = arith.constant 0 : index
    %c0_27 = arith.constant 0 : index
    %c0_28 = arith.constant 0 : index
    %31 = vector.load %arg10[%c0_26, %c0_27, %c0_28] : memref<1x1x128xf32, #tpu.memory_space<vmem>>, vector<1x1x128xf32>
    %32 = vector.shape_cast %31 : vector<1x1x128xf32> to vector<1x128xf32>
    %33 = vector.broadcast %32 : vector<1x128xf32> to vector<128x128xf32>
    %34 = arith.addf %30, %33 : vector<128x128xf32>
    %c2_i32 = arith.constant 2 : i32
    %35 = arith.cmpi slt, %arg0, %c2_i32 : i32
    %36 = arith.extui %35 : i1 to i32
    %c0_i32_29 = arith.constant 0 : i32
    %37 = arith.cmpi ne, %36, %c0_i32_29 : i32
    scf.if %37 {
      %cst_32 = arith.constant 0.000000e+00 : f32
      %41 = vector.broadcast %cst_32 : f32 to vector<128x128xf32>
      %42 = arith.maximumf %34, %41 : vector<128x128xf32>
      %c0_33 = arith.constant 0 : index
      %c0_34 = arith.constant 0 : index
      %43 = vector.load %arg13[%c0_33, %c0_34] : memref<128x128xf32, #tpu.memory_space<vmem>>, vector<128x128xf32>
      tpu.vector_store %arg13[%c0_33, %c0_34], %42 {strides = array<i32>} : memref<128x128xf32, #tpu.memory_space<vmem>>, vector<128x128xf32>,
    } else {
    }
    %c2_i32_30 = arith.constant 2 : i32
    %38 = arith.cmpi eq, %arg0, %c2_i32_30 : i32
    %39 = arith.extui %38 : i1 to i32
    %c0_i32_31 = arith.constant 0 : i32
    %40 = arith.cmpi ne, %39, %c0_i32_31 : i32
    scf.if %40 {
      %c0_32 = arith.constant 0 : index
      %c0_33 = arith.constant 0 : index
      %41 = vector.load %arg11[%c0_32, %c0_33] : memref<8x128xf32, #tpu.memory_space<vmem>>, vector<8x128xf32>
      %cst_34 = arith.constant dense<0.000000e+00> : vector<8x128xf32>
      %42 = tpu.matmul %41, %34, %cst_34 {dimension_numbers = #tpu.dot_dimension_numbers<[1], [0], [0], [1], [0, 0, 1, 1], [], []>} : vector<8x128xf32>, vector<128x128xf32>, vector<8x128xf32> -> vector<8x128xf32>
      %c0_35 = arith.constant 0 : index
      %c0_36 = arith.constant 0 : index
      %43 = vector.load %arg12[%c0_35, %c0_36] : memref<8x128xf32, #tpu.memory_space<vmem>>, vector<8x128xf32>
      tpu.vector_store %arg12[%c0_35, %c0_36], %42 {strides = array<i32>} : memref<8x128xf32, #tpu.memory_space<vmem>>, vector<8x128xf32>,
    } else {
    }
    return
  }
  func.func @transform_0(%arg0: i32, %arg1: memref<256xi32, #tpu.memory_space<smem>>, %arg2: memref<256xi32, #tpu.memory_space<smem>>) -> (i32, i32) {
    %c0_i32 = arith.constant 0 : i32
    %c0_i32_0 = arith.constant 0 : i32
    %c0_i32_1 = arith.constant 0 : i32
    return %c0_i32, %c0_i32_0 : i32, i32
  }
  func.func @transform_1(%arg0: i32, %arg1: memref<256xi32, #tpu.memory_space<smem>>, %arg2: memref<256xi32, #tpu.memory_space<smem>>) -> (i32, i32, i32) {
    %c0_i32 = arith.constant 0 : i32
    %c0_i32_0 = arith.constant 0 : i32
    %c0_i32_1 = arith.constant 0 : i32
    return %arg0, %c0_i32, %c0_i32_0 : i32, i32, i32
  }
  func.func @transform_2(%arg0: i32, %arg1: memref<256xi32, #tpu.memory_space<smem>>, %arg2: memref<256xi32, #tpu.memory_space<smem>>) -> (i32, i32, i32) {
    %c0_i32 = arith.constant 0 : i32
    %c0_i32_0 = arith.constant 0 : i32
    %c0_i32_1 = arith.constant 0 : i32
    return %arg0, %c0_i32, %c0_i32_0 : i32, i32, i32
  }
  func.func @transform_3(%arg0: i32, %arg1: memref<256xi32, #tpu.memory_space<smem>>, %arg2: memref<256xi32, #tpu.memory_space<smem>>) -> (i32, i32, i32) {
    %c0_i32 = arith.constant 0 : i32
    %c0_i32_0 = arith.constant 0 : i32
    %c0_i32_1 = arith.constant 0 : i32
    return %arg0, %c0_i32, %c0_i32_0 : i32, i32, i32
  }
  func.func @transform_4(%arg0: i32, %arg1: memref<256xi32, #tpu.memory_space<smem>>, %arg2: memref<256xi32, #tpu.memory_space<smem>>) -> (i32, i32, i32) {
    %c0_i32 = arith.constant 0 : i32
    %c0_i32_0 = arith.constant 0 : i32
    %c0_i32_1 = arith.constant 0 : i32
    return %arg0, %c0_i32, %c0_i32_0 : i32, i32, i32
  }
  func.func @transform_5(%arg0: i32, %arg1: memref<256xi32, #tpu.memory_space<smem>>, %arg2: memref<256xi32, #tpu.memory_space<smem>>) -> (i32, i32, i32) {
    %c0_i32 = arith.constant 0 : i32
    %c0_i32_0 = arith.constant 0 : i32
    %c0_i32_1 = arith.constant 0 : i32
    return %arg0, %c0_i32, %c0_i32_0 : i32, i32, i32
  }
  func.func @transform_6(%arg0: i32, %arg1: memref<256xi32, #tpu.memory_space<smem>>, %arg2: memref<256xi32, #tpu.memory_space<smem>>) -> (i32, i32, i32) {
    %c0_i32 = arith.constant 0 : i32
    %c0_i32_0 = arith.constant 0 : i32
    %c0_i32_1 = arith.constant 0 : i32
    return %arg0, %c0_i32, %c0_i32_0 : i32, i32, i32
  }
  func.func @transform_7(%arg0: i32, %arg1: memref<256xi32, #tpu.memory_space<smem>>, %arg2: memref<256xi32, #tpu.memory_space<smem>>) -> (i32, i32, i32) {
    %c0_i32 = arith.constant 0 : i32
    %c0_i32_0 = arith.constant 0 : i32
    %c0_i32_1 = arith.constant 0 : i32
    return %arg0, %c0_i32, %c0_i32_0 : i32, i32, i32
  }
  func.func @transform_8(%arg0: i32, %arg1: memref<256xi32, #tpu.memory_space<smem>>, %arg2: memref<256xi32, #tpu.memory_space<smem>>) -> (i32, i32) {
    %c0_i32 = arith.constant 0 : i32
    %c0_i32_0 = arith.constant 0 : i32
    %c0_i32_1 = arith.constant 0 : i32
    return %c0_i32, %c0_i32_0 : i32, i32
  }
  func.func @transform_9(%arg0: i32, %arg1: memref<256xi32, #tpu.memory_space<smem>>, %arg2: memref<256xi32, #tpu.memory_space<smem>>) -> (i32, i32) {
    %c0_i32 = arith.constant 0 : i32
    %c0_i32_0 = arith.constant 0 : i32
    %c0_i32_1 = arith.constant 0 : i32
    return %c0_i32, %c0_i32_0 : i32, i32
  }
}

</mosaic_0001>

<llo_original>
// kernel: tpu_custom_call.1
$region0: #{tpu_custom_call.1}
  #allocation0 [shape = 'u32[]', space=smem, size = 0x4, offset = 0x4, fixed_abs, tag = 'smem constant byte address 0x4 - core index']
  #allocation1 [shape = 'u32[144,128]{1,0:T(1,128)}', space=vmem, size = 0x12000, scoped, tag = 'internal scratch']
  #allocation2 [shape = 'f32[128,128]{1,0:T(8,128)}', space=vmem, size = 0x10000, scoped, tag = 'scratch operand']
  #allocation3 [shape = 'f32[128,128]{1,0:T(8,128)}', space=vmem, size = 0x10000, scoped, tag = 'scratch operand']
  #allocation4 [shape = 's32[1]{0}', space=sflag, size = 0x4, scoped, tag = 'scoped memory for tpu_custom_call.1']
  #allocation5 [shape = 'u8[1024]{0}', space=smem, size = 0x400, scoped, tag = 'prefetched SMEM operand 0']
  #allocation6 [shape = 'u8[1024]{0}', space=smem, size = 0x400, scoped, tag = 'prefetched SMEM operand 1']
  %s0 = inlined_call_operand.hbm [shape: s32[256], index: 0, kind: input, shape index: {}]
  %s1 = inlined_call_operand.hbm [shape: s32[256], index: 1, kind: input, shape index: {}]
  %s2 = inlined_call_operand.hbm [shape: f32[128,128], index: 2, kind: input, shape index: {}]
  %s3 = inlined_call_operand.hbm [shape: f32[3,256,128], index: 3, kind: input, shape index: {}]
  %s4 = inlined_call_operand.hbm [shape: bf16[3,128,256], index: 4, kind: input, shape index: {}]
  %s5 = inlined_call_operand.vmem [shape: f32[3,1,256], index: 5, kind: input, shape index: {}]
  %s6 = inlined_call_operand.hbm [shape: f32[3,1,256], index: 6, kind: input, shape index: {}]
  %s7 = inlined_call_operand.hbm [shape: bf16[3,256,128], index: 7, kind: input, shape index: {}]
  %s8 = inlined_call_operand.hbm [shape: f32[3,1,128], index: 8, kind: input, shape index: {}]
  %s9 = inlined_call_operand.hbm [shape: f32[3,1,128], index: 9, kind: input, shape index: {}]
  %s10 = inlined_call_operand.vmem [shape: f32[8,128], index: 10, kind: input, shape index: {}]
  %s11 = inlined_call_operand.hbm [shape: f32[8,128], index: 11, kind: output, shape index: {}]
  %s12 = sld [smem:[#allocation0]]
  $region116: #{tpu_custom_call.1} parent=0
    _
  %s14 = ssub.s32 1, %s12
  %s15 = scalar_select 0, %s14, %s12
  %17 = dma.hbm_to_smem %s0, 32, [#allocation5], [#allocation4]
  %19 = dma.hbm_to_smem %s1, 32, [#allocation6], [#allocation4]
  %20 = dma.done [#allocation4], 64
  %21 = sfence
  $region1: #{tpu_custom_call.1} parent=0
    #allocation7 [shape = 'u8[65536]{0}', space=vmem, size = 0x10000, scoped, tag = 'input window, operand 2, single buffered']
    #allocation8 [shape = 's32[2]{0}', space=sflag, size = 0x8, scoped, tag = 'scoped memory for tpu_custom_call.1']
    #allocation9 [shape = 's32[2]{0}', space=sflag, size = 0x8, scoped, tag = 'scoped memory for tpu_custom_call.1']
    #allocation10 [shape = 'u8[262144]{0}', space=vmem, size = 0x40000, scoped, tag = 'input window, operand 3']
    #allocation11 [shape = 's32[2]{0}', space=sflag, size = 0x8, scoped, tag = 'scoped memory for tpu_custom_call.1']
    #allocation12 [shape = 'u8[131072]{0}', space=vmem, size = 0x20000, scoped, tag = 'input window, operand 4']
    #allocation13 [shape = 'u8[2048]{0}', space=vmem, size = 0x800, scoped, tag = 'input window, operand 6']
    #allocation14 [shape = 's32[2]{0}', space=sflag, size = 0x8, scoped, tag = 'scoped memory for tpu_custom_call.1']
    #allocation15 [shape = 'u8[131072]{0}', space=vmem, size = 0x20000, scoped, tag = 'input window, operand 7']
    #allocation16 [shape = 'u8[1024]{0}', space=vmem, size = 0x400, scoped, tag = 'input window, operand 8']
    #allocation17 [shape = 's32[2]{0}', space=sflag, size = 0x8, scoped, tag = 'scoped memory for tpu_custom_call.1']
    #allocation18 [shape = 'u8[1024]{0}', space=vmem, size = 0x400, scoped, tag = 'input window, operand 9']
    #allocation19 [shape = 'u8[4096]{0}', space=vmem, size = 0x1000, scoped, tag = 'output window, operand 0, single buffered']
    %22 = vsyncpa [#allocation8], 0
    %23 = vsyncpa [#allocation11], 0
    %s24 = scalar_lea.sflag [#allocation11], 1
    %25 = vsyncpa %s24, 0
    %26 = vsyncpa [#allocation14], 0
    %s27 = scalar_lea.sflag [#allocation14], 1
    %28 = vsyncpa %s27, 0
    %29 = vsyncpa [#allocation17], 0
    %s30 = scalar_lea.sflag [#allocation17], 1
    %31 = vsyncpa %s30, 0
    %32 = vsyncpa [#allocation9], 0
    loop: start=0, step=1, limit=5
    $region2: #{tpu_custom_call.1} parent=1 // loop_pre_header
      _
    $region3: #{tpu_custom_call.1} parent=1 // loop_header
      %s34 = sphi 0, %s38
      %p35 = scmp.ge.s32.totalorder %s34, 5
      %s42 = sphi 0, %s42
      %s44 = sphi 0, %s42
      %s45 = sphi 0, %s44
      %s59 = sphi 0, %s45
      %s65 = sphi 0, %s67
      %s68 = sphi 0, %s65
      %s69 = sphi 0, %s68
      %s85 = sphi 0, %s69
      %s91 = sphi 0, %s93
      %s94 = sphi 0, %s91
      %s95 = sphi 0, %s94
      %s111 = sphi 0, %s95
      %s117 = sphi 0, %s119
      %s120 = sphi 0, %s117
      %s121 = sphi 0, %s120
      %s137 = sphi 0, %s121
      %s143 = sphi 0, %s145
      %s146 = sphi 0, %s143
      %s147 = sphi 0, %s146
      %s163 = sphi 0, %s147
      %s169 = sphi 0, %s171
      %s172 = sphi 0, %s169
      %s173 = sphi 0, %s172
      %s189 = sphi 0, %s173
      %s195 = sphi 0, %s197
      %s198 = sphi 0, %s195
      %s199 = sphi 0, %s198
      %s215 = sphi 0, %s199
      %s221 = sphi 0, %s223
      %s224 = sphi 0, %s221
      %s225 = sphi 0, %s224
      %s241 = sphi 0, %s225
      %s245 = sphi 0, %s245
      %s247 = sphi 0, %s245
      %s248 = sphi 0, %s247
      %s262 = sphi 0, %s248
      %s266 = sphi 0, %s266
      %s268 = sphi 0, %s266
      %s269 = sphi 0, %s268
      %s283 = sphi 0, %s269
    $region4: #{tpu_custom_call.1} parent=1 // loop_header_branch
      %37 = sbr.rel (%p35) target = $region8
    $region5: #{tpu_custom_call.1} parent=1 // loop_body
      %s39 = ssub.s32 %s34, 1
      %s40 = ssub.s32 %s34, 2
      %s41 = sadd.s32 %s34, 1
      %s43 = sadd.s32 %s42, 1
      %p46 = scmp.eq.s32.totalorder %s34, 2
      %p47 = scmp.ne.s32.totalorder %s42, %s44
      %p48 = scmp.eq.s32.totalorder %s34, 0
      %p49 = por %p47, %p48
      %p50 = scmp.ne.s32.totalorder %s42, %s44
      %p51 = scmp.eq.s32.totalorder %s39, 2
      %p52 = por %p50, %p51
      %p53 = scmp.ne.s32.totalorder %s44, %s45
      %p54 = scmp.eq.s32.totalorder %s39, 0
      %p55 = por %p53, %p54
      %p56 = scmp.ne.s32.totalorder %s44, %s45
      %p57 = scmp.eq.s32.totalorder %s40, 2
      %p58 = por %p56, %p57
      %p60 = scmp.ne.s32.totalorder %s45, %s59
      %p61 = scmp.eq.s32.totalorder %s40, 0
      %p62 = por %p60, %p61
      %s63 = ssub.s32 %s34, %s41
      %p64 = scmp.eq.s32.totalorder %s63, 0
      %s66 = sadd.s32 %s65, 1
      %s67 = scalar_select %p64, %s65, %s66
      %p70 = pneg %p64
      %p71 = scmp.eq.s32.totalorder %s34, 2
      %p72 = por %p70, %p71
      %p73 = scmp.ne.s32.totalorder %s65, %s68
      %p74 = scmp.eq.s32.totalorder %s34, 0
      %p75 = por %p73, %p74
      %p76 = scmp.ne.s32.totalorder %s65, %s68
      %p77 = scmp.eq.s32.totalorder %s39, 2
      %p78 = por %p76, %p77
      %p79 = scmp.ne.s32.totalorder %s68, %s69
      %p80 = scmp.eq.s32.totalorder %s39, 0
      %p81 = por %p79, %p80
      %p82 = scmp.ne.s32.totalorder %s68, %s69
      %p83 = scmp.eq.s32.totalorder %s40, 2
      %p84 = por %p82, %p83
      %p86 = scmp.ne.s32.totalorder %s69, %s85
      %p87 = scmp.eq.s32.totalorder %s40, 0
      %p88 = por %p86, %p87
      %s89 = ssub.s32 %s34, %s41
      %p90 = scmp.eq.s32.totalorder %s89, 0
      %s92 = sadd.s32 %s91, 1
      %s93 = scalar_select %p90, %s91, %s92
      %p96 = pneg %p90
      %p97 = scmp.eq.s32.totalorder %s34, 2
      %p98 = por %p96, %p97
      %p99 = scmp.ne.s32.totalorder %s91, %s94
      %p100 = scmp.eq.s32.totalorder %s34, 0
      %p101 = por %p99, %p100
      %p102 = scmp.ne.s32.totalorder %s91, %s94
      %p103 = scmp.eq.s32.totalorder %s39, 2
      %p104 = por %p102, %p103
      %p105 = scmp.ne.s32.totalorder %s94, %s95
      %p106 = scmp.eq.s32.totalorder %s39, 0
      %p107 = por %p105, %p106
      %p108 = scmp.ne.s32.totalorder %s94, %s95
      %p109 = scmp.eq.s32.totalorder %s40, 2
      %p110 = por %p108, %p109
      %p112 = scmp.ne.s32.totalorder %s95, %s111
      %p113 = scmp.eq.s32.totalorder %s40, 0
      %p114 = por %p112, %p113
      %s115 = ssub.s32 %s34, %s41
      %p116 = scmp.eq.s32.totalorder %s115, 0
      %s118 = sadd.s32 %s117, 1
      %s119 = scalar_select %p116, %s117, %s118
      %p122 = pneg %p116
      %p123 = scmp.eq.s32.totalorder %s34, 2
      %p124 = por %p122, %p123
      %p125 = scmp.ne.s32.totalorder %s117, %s120
      %p126 = scmp.eq.s32.totalorder %s34, 0
      %p127 = por %p125, %p126
      %p128 = scmp.ne.s32.totalorder %s117, %s120
      %p129 = scmp.eq.s32.totalorder %s39, 2
      %p130 = por %p128, %p129
      %p131 = scmp.ne.s32.totalorder %s120, %s121
      %p132 = scmp.eq.s32.totalorder %s39, 0
      %p133 = por %p131, %p132
      %p134 = scmp.ne.s32.totalorder %s120, %s121
      %p135 = scmp.eq.s32.totalorder %s40, 2
      %p136 = por %p134, %p135
      %p138 = scmp.ne.s32.totalorder %s121, %s137
      %p139 = scmp.eq.s32.totalorder %s40, 0
      %p140 = por %p138, %p139
      %s141 = ssub.s32 %s34, %s41
      %p142 = scmp.eq.s32.totalorder %s141, 0
      %s144 = sadd.s32 %s143, 1
      %s145 = scalar_select %p142, %s143, %s144
      %p148 = pneg %p142
      %p149 = scmp.eq.s32.totalorder %s34, 2
      %p150 = por %p148, %p149
      %p151 = scmp.ne.s32.totalorder %s143, %s146
      %p152 = scmp.eq.s32.totalorder %s34, 0
      %p153 = por %p151, %p152
      %p154 = scmp.ne.s32.totalorder %s143, %s146
      %p155 = scmp.eq.s32.totalorder %s39, 2
      %p156 = por %p154, %p155
      %p157 = scmp.ne.s32.totalorder %s146, %s147
      %p158 = scmp.eq.s32.totalorder %s39, 0
      %p159 = por %p157, %p158
      %p160 = scmp.ne.s32.totalorder %s146, %s147
      %p161 = scmp.eq.s32.totalorder %s40, 2
      %p162 = por %p160, %p161
      %p164 = scmp.ne.s32.totalorder %s147, %s163
      %p165 = scmp.eq.s32.totalorder %s40, 0
      %p166 = por %p164, %p165
      %s167 = ssub.s32 %s34, %s41
      %p168 = scmp.eq.s32.totalorder %s167, 0
      %s170 = sadd.s32 %s169, 1
      %s171 = scalar_select %p168, %s169, %s170
      %p174 = pneg %p168
      %p175 = scmp.eq.s32.totalorder %s34, 2
      %p176 = por %p174, %p175
      %p177 = scmp.ne.s32.totalorder %s169, %s172
      %p178 = scmp.eq.s32.totalorder %s34, 0
      %p179 = por %p177, %p178
      %p180 = scmp.ne.s32.totalorder %s169, %s172
      %p181 = scmp.eq.s32.totalorder %s39, 2
      %p182 = por %p180, %p181
      %p183 = scmp.ne.s32.totalorder %s172, %s173
      %p184 = scmp.eq.s32.totalorder %s39, 0
      %p185 = por %p183, %p184
      %p186 = scmp.ne.s32.totalorder %s172, %s173
      %p187 = scmp.eq.s32.totalorder %s40, 2
      %p188 = por %p186, %p187
      %p190 = scmp.ne.s32.totalorder %s173, %s189
      %p191 = scmp.eq.s32.totalorder %s40, 0
      %p192 = por %p190, %p191
      %s193 = ssub.s32 %s34, %s41
      %p194 = scmp.eq.s32.totalorder %s193, 0
      %s196 = sadd.s32 %s195, 1
      %s197 = scalar_select %p194, %s195, %s196
      %p200 = pneg %p194
      %p201 = scmp.eq.s32.totalorder %s34, 2
      %p202 = por %p200, %p201
      %p203 = scmp.ne.s32.totalorder %s195, %s198
      %p204 = scmp.eq.s32.totalorder %s34, 0
      %p205 = por %p203, %p204
      %p206 = scmp.ne.s32.totalorder %s195, %s198
      %p207 = scmp.eq.s32.totalorder %s39, 2
      %p208 = por %p206, %p207
      %p209 = scmp.ne.s32.totalorder %s198, %s199
      %p210 = scmp.eq.s32.totalorder %s39, 0
      %p211 = por %p209, %p210
      %p212 = scmp.ne.s32.totalorder %s198, %s199
      %p213 = scmp.eq.s32.totalorder %s40, 2
      %p214 = por %p212, %p213
      %p216 = scmp.ne.s32.totalorder %s199, %s215
      %p217 = scmp.eq.s32.totalorder %s40, 0
      %p218 = por %p216, %p217
      %s219 = ssub.s32 %s34, %s41
      %p220 = scmp.eq.s32.totalorder %s219, 0
      %s222 = sadd.s32 %s221, 1
      %s223 = scalar_select %p220, %s221, %s222
      %p226 = pneg %p220
      %p227 = scmp.eq.s32.totalorder %s34, 2
      %p228 = por %p226, %p227
      %p229 = scmp.ne.s32.totalorder %s221, %s224
      %p230 = scmp.eq.s32.totalorder %s34, 0
      %p231 = por %p229, %p230
      %p232 = scmp.ne.s32.totalorder %s221, %s224
      %p233 = scmp.eq.s32.totalorder %s39, 2
      %p234 = por %p232, %p233
      %p235 = scmp.ne.s32.totalorder %s224, %s225
      %p236 = scmp.eq.s32.totalorder %s39, 0
      %p237 = por %p235, %p236
      %p238 = scmp.ne.s32.totalorder %s224, %s225
      %p239 = scmp.eq.s32.totalorder %s40, 2
      %p240 = por %p238, %p239
      %p242 = scmp.ne.s32.totalorder %s225, %s241
      %p243 = scmp.eq.s32.totalorder %s40, 0
      %p244 = por %p242, %p243
      %s246 = sadd.s32 %s245, 1
      %p249 = scmp.eq.s32.totalorder %s34, 2
      %p250 = scmp.ne.s32.totalorder %s245, %s247
      %p251 = scmp.eq.s32.totalorder %s34, 0
      %p252 = por %p250, %p251
      %p253 = scmp.ne.s32.totalorder %s245, %s247
      %p254 = scmp.eq.s32.totalorder %s39, 2
      %p255 = por %p253, %p254
      %p256 = scmp.ne.s32.totalorder %s247, %s248
      %p257 = scmp.eq.s32.totalorder %s39, 0
      %p258 = por %p256, %p257
      %p259 = scmp.ne.s32.totalorder %s247, %s248
      %p260 = scmp.eq.s32.totalorder %s40, 2
      %p261 = por %p259, %p260
      %p263 = scmp.ne.s32.totalorder %s248, %s262
      %p264 = scmp.eq.s32.totalorder %s40, 0
      %p265 = por %p263, %p264
      %s267 = sadd.s32 %s266, 1
      %p270 = scmp.eq.s32.totalorder %s34, 2
      %p271 = scmp.ne.s32.totalorder %s266, %s268
      %p272 = scmp.eq.s32.totalorder %s34, 0
      %p273 = por %p271, %p272
      %p274 = scmp.ne.s32.totalorder %s266, %s268
      %p275 = scmp.eq.s32.totalorder %s39, 2
      %p276 = por %p274, %p275
      %p277 = scmp.ne.s32.totalorder %s268, %s269
      %p278 = scmp.eq.s32.totalorder %s39, 0
      %p279 = por %p277, %p278
      %p280 = scmp.ne.s32.totalorder %s268, %s269
      %p281 = scmp.eq.s32.totalorder %s40, 2
      %p282 = por %p280, %p281
      %p284 = scmp.ne.s32.totalorder %s269, %s283
      %p285 = scmp.eq.s32.totalorder %s40, 0
      %p286 = por %p284, %p285
      %p287 = scmp.le.s32.totalorder 1, %s34
      %p288 = scmp.lt.s32.totalorder %s34, 4
      %p289 = pnand %p287, %p288
      %p290 = pneg %p289
      // Predicated region
      $region9: #{tpu_custom_call.1} parent=5 // pred_check
        _
      $region10: #{tpu_custom_call.1} parent=5 // pred_check_branch
        %292 = sbr.rel (%p289) target = $region12
      $region11: #{tpu_custom_call.1} parent=5 // pred_region
        %s293 = ssub.s32 %s34, 1
        // Predicated region
        $region13: #{tpu_custom_call.1} parent=11 // pred_check
          %p294 = pneg %p55
        $region14: #{tpu_custom_call.1} parent=11 // pred_check_branch
          %296 = sbr.rel (%p294) target = $region16
        $region15: #{tpu_custom_call.1} parent=11 // pred_region
          %s298 = ssub.s32 2048, 2048
          %299 = vsyncadd [#allocation8], %s298
          %s300 = sshll.u32 [#allocation7], 4
          %s301 = int_to_ptr.vmem [resolvable:$true] %s300
          %306 = dma.hbm_to_vmem [thread:$0]  %s2, 2048, %s301, [#allocation8], 128, 128, 8
        $region16: #{tpu_custom_call.1} parent=11 // pred_fallthru
          _
        // Predicated region
        $region17: #{tpu_custom_call.1} parent=11 // pred_check
          %p307 = pneg %p258
        $region18: #{tpu_custom_call.1} parent=11 // pred_check_branch
          %309 = sbr.rel (%p307) target = $region20
        $region19: #{tpu_custom_call.1} parent=11 // pred_region
          _
        $region20: #{tpu_custom_call.1} parent=11 // pred_fallthru
          _
      $region12: #{tpu_custom_call.1} parent=5 // pred_fallthru
        _
      %p310 = scmp.lt.s32.totalorder %s34, 3
      // Predicated region
      $region21: #{tpu_custom_call.1} parent=5 // pred_check
        %p311 = pneg %p310
      $region22: #{tpu_custom_call.1} parent=5 // pred_check_branch
        %313 = sbr.rel (%p311) target = $region24
      $region23: #{tpu_custom_call.1} parent=5 // pred_region
        // Predicated region
        $region25: #{tpu_custom_call.1} parent=23 // pred_check
          %p314 = pneg %p75
        $region26: #{tpu_custom_call.1} parent=23 // pred_check_branch
          %316 = sbr.rel (%p314) target = $region28
        $region27: #{tpu_custom_call.1} parent=23 // pred_region
          %s317 = sand.u32 %s34, 1
          %s318 = scalar_lea.sflag [#allocation11], %s317
          %s319 = sand.u32 %s65, 1
          %s320 = smul.addr %s319, 256
          %s321 = scalar_lea.vmem [#allocation10], %s320
          %s323 = ssub.s32 4096, 4096
          %324 = vsyncadd %s318, %s323
          %s325 = smul.addr %s34, 32
          %s326 = smul.addr %s325, 128
          %s327 = scalar_lea.hbm %s3, %s326
          %s328 = sshll.u32 %s321, 4
          %s329 = int_to_ptr.vmem [resolvable:$true] %s328
          %334 = dma.hbm_to_vmem [thread:$0]  %s327, 4096, %s329, %s318, 128, 128, 8
        $region28: #{tpu_custom_call.1} parent=23 // pred_fallthru
          _
        // Predicated region
        $region29: #{tpu_custom_call.1} parent=23 // pred_check
          %p335 = pneg %p101
        $region30: #{tpu_custom_call.1} parent=23 // pred_check_branch
          %337 = sbr.rel (%p335) target = $region32
        $region31: #{tpu_custom_call.1} parent=23 // pred_region
          %s338 = sand.u32 %s34, 1
          %s339 = scalar_lea.sflag [#allocation11], %s338
          %s340 = sand.u32 %s91, 1
          %s341 = smul.addr %s340, 128
          %s342 = scalar_lea.vmem [#allocation12], %s341
          %s344 = ssub.s32 2048, 2048
          %345 = vsyncadd %s339, %s344
          %s346 = smul.addr %s34, 32
          %s347 = smul.addr %s346, 64
          %s348 = scalar_lea.hbm %s4, %s347
          %s349 = sshll.u32 %s342, 4
          %s350 = int_to_ptr.vmem [resolvable:$true] %s349
          %355 = dma.hbm_to_vmem [thread:$0]  %s348, 2048, %s350, %s339, 128, 128, 8
        $region32: #{tpu_custom_call.1} parent=23 // pred_fallthru
          _
        // Predicated region
        $region33: #{tpu_custom_call.1} parent=23 // pred_check
          %p356 = pneg %p127
        $region34: #{tpu_custom_call.1} parent=23 // pred_check_branch
          %358 = sbr.rel (%p356) target = $region36
        $region35: #{tpu_custom_call.1} parent=23 // pred_region
          %p359 = scmp.lt.s32.totalorder %s34, 2
          %s360 = scalar_select %p359, %s34, 2
          %s361 = smul.addr %s360, 2
          %s362 = scalar_lea.vmem %s5, %s361
        $region36: #{tpu_custom_call.1} parent=23 // pred_fallthru
          _
        // Predicated region
        $region37: #{tpu_custom_call.1} parent=23 // pred_check
          %p363 = pneg %p153
        $region38: #{tpu_custom_call.1} parent=23 // pred_check_branch
          %365 = sbr.rel (%p363) target = $region40
        $region39: #{tpu_custom_call.1} parent=23 // pred_region
          %s366 = sand.u32 %s34, 1
          %s367 = scalar_lea.sflag [#allocation14], %s366
          %s368 = sand.u32 %s143, 1
          %s369 = smul.addr %s368, 2
          %s370 = scalar_lea.vmem [#allocation13], %s369
          %s372 = ssub.s32 32, 32
          %373 = vsyncadd %s367, %s372
          %s374 = smul.addr %s34, 2
          %s375 = smul.addr %s374, 16
          %s376 = scalar_lea.hbm %s6, %s375
          %s378 = sshll.u32 %s370, 4
          %s379 = int_to_ptr.vmem [resolvable:$true] %s378
          %381 = dma.hbm_to_vmem [thread:$0]  %s376, 32, %s379, %s367
        $region40: #{tpu_custom_call.1} parent=23 // pred_fallthru
          _
        // Predicated region
        $region41: #{tpu_custom_call.1} parent=23 // pred_check
          %p382 = pneg %p179
        $region42: #{tpu_custom_call.1} parent=23 // pred_check_branch
          %384 = sbr.rel (%p382) target = $region44
        $region43: #{tpu_custom_call.1} parent=23 // pred_region
          %s385 = sand.u32 %s34, 1
          %s386 = scalar_lea.sflag [#allocation14], %s385
          %s387 = sand.u32 %s169, 1
          %s388 = smul.addr %s387, 128
          %s389 = scalar_lea.vmem [#allocation15], %s388
          %s391 = ssub.s32 2048, 2048
          %392 = vsyncadd %s386, %s391
          %s393 = smul.addr %s34, 32
          %s394 = smul.addr %s393, 64
          %s395 = scalar_lea.hbm %s7, %s394
          %s396 = sshll.u32 %s389, 4
          %s397 = int_to_ptr.vmem [resolvable:$true] %s396
          %402 = dma.hbm_to_vmem [thread:$0]  %s395, 2048, %s397, %s386, 64, 64, 4
        $region44: #{tpu_custom_call.1} parent=23 // pred_fallthru
          _
        // Predicated region
        $region45: #{tpu_custom_call.1} parent=23 // pred_check
          %p403 = pneg %p205
        $region46: #{tpu_custom_call.1} parent=23 // pred_check_branch
          %405 = sbr.rel (%p403) target = $region48
        $region47: #{tpu_custom_call.1} parent=23 // pred_region
          %s406 = sand.u32 %s34, 1
          %s407 = scalar_lea.sflag [#allocation17], %s406
          %s408 = sand.u32 %s195, 1
          %s409 = scalar_lea.vmem [#allocation16], %s408
          %s411 = ssub.s32 16, 16
          %412 = vsyncadd %s407, %s411
          %s413 = smul.addr %s34, 16
          %s414 = scalar_lea.hbm %s8, %s413
          %s416 = sshll.u32 %s409, 4
          %s417 = int_to_ptr.vmem [resolvable:$true] %s416
          %419 = dma.hbm_to_vmem [thread:$0]  %s414, 16, %s417, %s407
        $region48: #{tpu_custom_call.1} parent=23 // pred_fallthru
          _
        // Predicated region
        $region49: #{tpu_custom_call.1} parent=23 // pred_check
          %p420 = pneg %p231
        $region50: #{tpu_custom_call.1} parent=23 // pred_check_branch
          %422 = sbr.rel (%p420) target = $region52
        $region51: #{tpu_custom_call.1} parent=23 // pred_region
          %s423 = sand.u32 %s34, 1
          %s424 = scalar_lea.sflag [#allocation17], %s423
          %s425 = sand.u32 %s221, 1
          %s426 = scalar_lea.vmem [#allocation18], %s425
          %s428 = ssub.s32 16, 16
          %429 = vsyncadd %s424, %s428
          %s430 = smul.addr %s34, 16
          %s431 = scalar_lea.hbm %s9, %s430
          %s433 = sshll.u32 %s426, 4
          %s434 = int_to_ptr.vmem [resolvable:$true] %s433
          %436 = dma.hbm_to_vmem [thread:$0]  %s431, 16, %s434, %s424
        $region52: #{tpu_custom_call.1} parent=23 // pred_fallthru
          _
      $region24: #{tpu_custom_call.1} parent=5 // pred_fallthru
        _
      %p437 = scmp.le.s32.totalorder 1, %s34
      %p438 = scmp.lt.s32.totalorder %s34, 4
      %p439 = pnand %p437, %p438
      %p440 = pneg %p439
      // Predicated region
      $region53: #{tpu_custom_call.1} parent=5 // pred_check
        _
      $region54: #{tpu_custom_call.1} parent=5 // pred_check_branch
        %442 = sbr.rel (%p439) target = $region56
      $region55: #{tpu_custom_call.1} parent=5 // pred_region
        %s443 = ssub.s32 %s34, 1
        // Predicated region
        $region57: #{tpu_custom_call.1} parent=55 // pred_check
          %p444 = pneg %p55
        $region58: #{tpu_custom_call.1} parent=55 // pred_check_branch
          %446 = sbr.rel (%p444) target = $region60
        $region59: #{tpu_custom_call.1} parent=55 // pred_region
          %447 = dma.done [#allocation8], 2048
        $region60: #{tpu_custom_call.1} parent=55 // pred_fallthru
          _
        %s448 = sand.u32 %s39, 1
        %s449 = scalar_lea.sflag [#allocation11], %s448
        %s450 = sand.u32 %s68, 1
        %s451 = smul.addr %s450, 256
        %s452 = scalar_lea.vmem [#allocation10], %s451
        // Predicated region
        $region61: #{tpu_custom_call.1} parent=55 // pred_check
          %p453 = pneg %p81
        $region62: #{tpu_custom_call.1} parent=55 // pred_check_branch
          %455 = sbr.rel (%p453) target = $region64
        $region63: #{tpu_custom_call.1} parent=55 // pred_region
          %456 = dma.done %s449, 4096
        $region64: #{tpu_custom_call.1} parent=55 // pred_fallthru
          _
        %s457 = sand.u32 %s39, 1
        %s458 = scalar_lea.sflag [#allocation11], %s457
        %s459 = sand.u32 %s94, 1
        %s460 = smul.addr %s459, 128
        %s461 = scalar_lea.vmem [#allocation12], %s460
        // Predicated region
        $region65: #{tpu_custom_call.1} parent=55 // pred_check
          %p462 = pneg %p107
        $region66: #{tpu_custom_call.1} parent=55 // pred_check_branch
          %464 = sbr.rel (%p462) target = $region68
        $region67: #{tpu_custom_call.1} parent=55 // pred_region
          %465 = dma.done %s458, 2048
        $region68: #{tpu_custom_call.1} parent=55 // pred_fallthru
          _
        %s466 = sand.u32 %s39, 1
        %s467 = scalar_lea.sflag [#allocation14], %s466
        %s468 = sand.u32 %s146, 1
        %s469 = smul.addr %s468, 2
        %s470 = scalar_lea.vmem [#allocation13], %s469
        // Predicated region
        $region69: #{tpu_custom_call.1} parent=55 // pred_check
          %p471 = pneg %p159
        $region70: #{tpu_custom_call.1} parent=55 // pred_check_branch
          %473 = sbr.rel (%p471) target = $region72
        $region71: #{tpu_custom_call.1} parent=55 // pred_region
          %474 = dma.done %s467, 32
        $region72: #{tpu_custom_call.1} parent=55 // pred_fallthru
          _
        %s475 = sand.u32 %s39, 1
        %s476 = scalar_lea.sflag [#allocation14], %s475
        %s477 = sand.u32 %s172, 1
        %s478 = smul.addr %s477, 128
        %s479 = scalar_lea.vmem [#allocation15], %s478
        // Predicated region
        $region73: #{tpu_custom_call.1} parent=55 // pred_check
          %p480 = pneg %p185
        $region74: #{tpu_custom_call.1} parent=55 // pred_check_branch
          %482 = sbr.rel (%p480) target = $region76
        $region75: #{tpu_custom_call.1} parent=55 // pred_region
          %483 = dma.done %s476, 2048
        $region76: #{tpu_custom_call.1} parent=55 // pred_fallthru
          _
        %s484 = sand.u32 %s39, 1
        %s485 = scalar_lea.sflag [#allocation17], %s484
        %s486 = sand.u32 %s198, 1
        %s487 = scalar_lea.vmem [#allocation16], %s486
        // Predicated region
        $region77: #{tpu_custom_call.1} parent=55 // pred_check
          %p488 = pneg %p211
        $region78: #{tpu_custom_call.1} parent=55 // pred_check_branch
          %490 = sbr.rel (%p488) target = $region80
        $region79: #{tpu_custom_call.1} parent=55 // pred_region
          %491 = dma.done %s485, 16
        $region80: #{tpu_custom_call.1} parent=55 // pred_fallthru
          _
        %s492 = sand.u32 %s39, 1
        %s493 = scalar_lea.sflag [#allocation17], %s492
        %s494 = sand.u32 %s224, 1
        %s495 = scalar_lea.vmem [#allocation18], %s494
        // Predicated region
        $region81: #{tpu_custom_call.1} parent=55 // pred_check
          %p496 = pneg %p237
        $region82: #{tpu_custom_call.1} parent=55 // pred_check_branch
          %498 = sbr.rel (%p496) target = $region84
        $region83: #{tpu_custom_call.1} parent=55 // pred_region
          %499 = dma.done %s493, 16
        $region84: #{tpu_custom_call.1} parent=55 // pred_fallthru
          _
        %p500 = pneg %p55
        %p501 = pneg %p52
        %s502 = sand.u32 %s39, 1
        %s503 = scalar_lea.sflag [#allocation11], %s502
        %s504 = sand.u32 %s68, 1
        %s505 = smul.addr %s504, 256
        %s506 = scalar_lea.vmem [#allocation10], %s505
        %p507 = pneg %p81
        %p508 = pneg %p78
        %s509 = sand.u32 %s39, 1
        %s510 = scalar_lea.sflag [#allocation11], %s509
        %s511 = sand.u32 %s94, 1
        %s512 = smul.addr %s511, 128
        %s513 = scalar_lea.vmem [#allocation12], %s512
        %p514 = pneg %p107
        %p515 = pneg %p104
        %p516 = scmp.lt.s32.totalorder %s39, 2
        %s517 = scalar_select %p516, %s39, 2
        %s518 = smul.addr %s517, 2
        %s519 = scalar_lea.vmem %s5, %s518
        %p520 = pneg %p133
        %p521 = pneg %p130
        %s522 = sand.u32 %s39, 1
        %s523 = scalar_lea.sflag [#allocation14], %s522
        %s524 = sand.u32 %s146, 1
        %s525 = smul.addr %s524, 2
        %s526 = scalar_lea.vmem [#allocation13], %s525
        %p527 = pneg %p159
        %p528 = pneg %p156
        %s529 = sand.u32 %s39, 1
        %s530 = scalar_lea.sflag [#allocation14], %s529
        %s531 = sand.u32 %s172, 1
        %s532 = smul.addr %s531, 128
        %s533 = scalar_lea.vmem [#allocation15], %s532
        %p534 = pneg %p185
        %p535 = pneg %p182
        %s536 = sand.u32 %s39, 1
        %s537 = scalar_lea.sflag [#allocation17], %s536
        %s538 = sand.u32 %s198, 1
        %s539 = scalar_lea.vmem [#allocation16], %s538
        %p540 = pneg %p211
        %p541 = pneg %p208
        %s542 = sand.u32 %s39, 1
        %s543 = scalar_lea.sflag [#allocation17], %s542
        %s544 = sand.u32 %s224, 1
        %s545 = scalar_lea.vmem [#allocation18], %s544
        %p546 = pneg %p237
        %p547 = pneg %p234
        %p548 = pneg %p258
        %p549 = pneg %p255
        %p550 = pneg %p279
        %p551 = pneg %p276
        %p552 = scmp.lt.s32.totalorder %s39, 2
        %s553 = scalar_select %p552, %s39, 2
        %s554 = smul.addr %s553, 2
        %s555 = scalar_lea.vmem %s5, %s554
        %p557 = scmp.eq.s32.totalorder %s39, 0
        // Predicated region
        $region85: #{tpu_custom_call.1} parent=55 // pred_check
          %p558 = pneg %p557
        $region86: #{tpu_custom_call.1} parent=55 // pred_check_branch
          %560 = sbr.rel (%p558) target = $region88
        $region87: #{tpu_custom_call.1} parent=55 // pred_region
          %v561 = vld [vmem:[#allocation7] sm:$0xff]
          %v562 = vld [vmem:[#allocation7 + $0x8] sm:$0xff]
          %v563 = vld [vmem:[#allocation7 + $0x10] sm:$0xff]
          %v564 = vld [vmem:[#allocation7 + $0x18] sm:$0xff]
          %v565 = vld [vmem:[#allocation7 + $0x20] sm:$0xff]
          %v566 = vld [vmem:[#allocation7 + $0x28] sm:$0xff]
          %v567 = vld [vmem:[#allocation7 + $0x30] sm:$0xff]
          %v568 = vld [vmem:[#allocation7 + $0x38] sm:$0xff]
          %v569 = vld [vmem:[#allocation7 + $0x40] sm:$0xff]
          %v570 = vld [vmem:[#allocation7 + $0x48] sm:$0xff]
          %v571 = vld [vmem:[#allocation7 + $0x50] sm:$0xff]
          %v572 = vld [vmem:[#allocation7 + $0x58] sm:$0xff]
          %v573 = vld [vmem:[#allocation7 + $0x60] sm:$0xff]
          %v574 = vld [vmem:[#allocation7 + $0x68] sm:$0xff]
          %v575 = vld [vmem:[#allocation7 + $0x70] sm:$0xff]
          %v576 = vld [vmem:[#allocation7 + $0x78] sm:$0xff]
          %577 = vst [vmem:[#allocation2] sm:$0xff] %v561
          %578 = vst [vmem:[#allocation2 + $0x8] sm:$0xff] %v562
          %579 = vst [vmem:[#allocation2 + $0x10] sm:$0xff] %v563
          %580 = vst [vmem:[#allocation2 + $0x18] sm:$0xff] %v564
          %581 = vst [vmem:[#allocation2 + $0x20] sm:$0xff] %v565
          %582 = vst [vmem:[#allocation2 + $0x28] sm:$0xff] %v566
          %583 = vst [vmem:[#allocation2 + $0x30] sm:$0xff] %v567
          %584 = vst [vmem:[#allocation2 + $0x38] sm:$0xff] %v568
          %585 = vst [vmem:[#allocation2 + $0x40] sm:$0xff] %v569
          %586 = vst [vmem:[#allocation2 + $0x48] sm:$0xff] %v570
          %587 = vst [vmem:[#allocation2 + $0x50] sm:$0xff] %v571
          %588 = vst [vmem:[#allocation2 + $0x58] sm:$0xff] %v572
          %589 = vst [vmem:[#allocation2 + $0x60] sm:$0xff] %v573
          %590 = vst [vmem:[#allocation2 + $0x68] sm:$0xff] %v574
          %591 = vst [vmem:[#allocation2 + $0x70] sm:$0xff] %v575
          %592 = vst [vmem:[#allocation2 + $0x78] sm:$0xff] %v576
        $region88: #{tpu_custom_call.1} parent=55 // pred_fallthru
          _
        %v593 = vld [vmem:[#allocation2] sm:$0xff]
        %v594 = vld [vmem:[#allocation2 + $0x8] sm:$0xff]
        %v595 = vld [vmem:[#allocation2 + $0x10] sm:$0xff]
        %v596 = vld [vmem:[#allocation2 + $0x18] sm:$0xff]
        %v597 = vld [vmem:[#allocation2 + $0x20] sm:$0xff]
        %v598 = vld [vmem:[#allocation2 + $0x28] sm:$0xff]
        %v599 = vld [vmem:[#allocation2 + $0x30] sm:$0xff]
        %v600 = vld [vmem:[#allocation2 + $0x38] sm:$0xff]
        %v601 = vld [vmem:[#allocation2 + $0x40] sm:$0xff]
        %v602 = vld [vmem:[#allocation2 + $0x48] sm:$0xff]
        %v603 = vld [vmem:[#allocation2 + $0x50] sm:$0xff]
        %v604 = vld [vmem:[#allocation2 + $0x58] sm:$0xff]
        %v605 = vld [vmem:[#allocation2 + $0x60] sm:$0xff]
        %v606 = vld [vmem:[#allocation2 + $0x68] sm:$0xff]
        %v607 = vld [vmem:[#allocation2 + $0x70] sm:$0xff]
        %v608 = vld [vmem:[#allocation2 + $0x78] sm:$0xff]
        %609 = vst [vmem:[#allocation3] sm:$0xff] %v593
        %610 = vst [vmem:[#allocation3 + $0x8] sm:$0xff] %v594
        %611 = vst [vmem:[#allocation3 + $0x10] sm:$0xff] %v595
        %612 = vst [vmem:[#allocation3 + $0x18] sm:$0xff] %v596
        %613 = vst [vmem:[#allocation3 + $0x20] sm:$0xff] %v597
        %614 = vst [vmem:[#allocation3 + $0x28] sm:$0xff] %v598
        %615 = vst [vmem:[#allocation3 + $0x30] sm:$0xff] %v599
        %616 = vst [vmem:[#allocation3 + $0x38] sm:$0xff] %v600
        %617 = vst [vmem:[#allocation3 + $0x40] sm:$0xff] %v601
        %618 = vst [vmem:[#allocation3 + $0x48] sm:$0xff] %v602
        %619 = vst [vmem:[#allocation3 + $0x50] sm:$0xff] %v603
        %620 = vst [vmem:[#allocation3 + $0x58] sm:$0xff] %v604
        %621 = vst [vmem:[#allocation3 + $0x60] sm:$0xff] %v605
        %622 = vst [vmem:[#allocation3 + $0x68] sm:$0xff] %v606
        %623 = vst [vmem:[#allocation3 + $0x70] sm:$0xff] %v607
        %624 = vst [vmem:[#allocation3 + $0x78] sm:$0xff] %v608
        loop: start=0, step=1, limit=32
        $region89: #{tpu_custom_call.1} parent=55 // loop_pre_header
          _
        $region90: #{tpu_custom_call.1} parent=55 // loop_header
          %s626 = sphi 0, %s630
          %p627 = scmp.ge.s32.totalorder %s626, 32
        $region91: #{tpu_custom_call.1} parent=55 // loop_header_branch
          %629 = sbr.rel (%p627) target = $region95
        $region92: #{tpu_custom_call.1} parent=55 // loop_body
          %s631 = smul.u32 %s626, 8
          %s632 = sld [smem:[#allocation5 + %s631]]
          %s633 = sld [smem:[#allocation6 + %s631]]
          %s634 = scalar_lea.vmem [#allocation2], %s632
          %v635 = vld [vmem:[%s634] sm:$0x1]
          %s636 = scalar_lea.vmem %s452, %s631 [#allocation10]
          %v637 = vld [vmem:[%s636] sm:$0x1]
          %v638 = vadd.f32 %v635, %v637
          %v639 = vmax.f32 %v638, 0.0
          %s640 = scalar_lea.vmem [#allocation3], %s633
          %v641 = vld [vmem:[%s640] sm:$0x1]
          %v642 = vadd.f32 %v641, %v639
          %643 = vst [vmem:[%s640] sm:$0x1] %v642
          %s644 = sadd.s32 %s631, 1
          %s645 = sld [smem:[#allocation5 + %s644]]
          %s646 = sld [smem:[#allocation6 + %s644]]
          %s647 = scalar_lea.vmem [#allocation2], %s645
          %v648 = vld [vmem:[%s647] sm:$0x1]
          %s649 = scalar_lea.vmem %s452, %s644 [#allocation10]
          %v650 = vld [vmem:[%s649] sm:$0x1]
          %v651 = vadd.f32 %v648, %v650
          %v652 = vmax.f32 %v651, 0.0
          %s653 = scalar_lea.vmem [#allocation3], %s646
          %v654 = vld [vmem:[%s653] sm:$0x1]
          %v655 = vadd.f32 %v654, %v652
          %656 = vst [vmem:[%s653] sm:$0x1] %v655
          %s657 = sadd.s32 %s631, 2
          %s658 = sld [smem:[#allocation5 + %s657]]
          %s659 = sld [smem:[#allocation6 + %s657]]
          %s660 = scalar_lea.vmem [#allocation2], %s658
          %v661 = vld [vmem:[%s660] sm:$0x1]
          %s662 = scalar_lea.vmem %s452, %s657 [#allocation10]
          %v663 = vld [vmem:[%s662] sm:$0x1]
          %v664 = vadd.f32 %v661, %v663
          %v665 = vmax.f32 %v664, 0.0
          %s666 = scalar_lea.vmem [#allocation3], %s659
          %v667 = vld [vmem:[%s666] sm:$0x1]
          %v668 = vadd.f32 %v667, %v665
          %669 = vst [vmem:[%s666] sm:$0x1] %v668
          %s670 = sadd.s32 %s631, 3
          %s671 = sld [smem:[#allocation5 + %s670]]
          %s672 = sld [smem:[#allocation6 + %s670]]
          %s673 = scalar_lea.vmem [#allocation2], %s671
          %v674 = vld [vmem:[%s673] sm:$0x1]
          %s675 = scalar_lea.vmem %s452, %s670 [#allocation10]
          %v676 = vld [vmem:[%s675] sm:$0x1]
          %v677 = vadd.f32 %v674, %v676
          %v678 = vmax.f32 %v677, 0.0
          %s679 = scalar_lea.vmem [#allocation3], %s672
          %v680 = vld [vmem:[%s679] sm:$0x1]
          %v681 = vadd.f32 %v680, %v678
          %682 = vst [vmem:[%s679] sm:$0x1] %v681
          %s683 = sadd.s32 %s631, 4
          %s684 = sld [smem:[#allocation5 + %s683]]
          %s685 = sld [smem:[#allocation6 + %s683]]
          %s686 = scalar_lea.vmem [#allocation2], %s684
          %v687 = vld [vmem:[%s686] sm:$0x1]
          %s688 = scalar_lea.vmem %s452, %s683 [#allocation10]
          %v689 = vld [vmem:[%s688] sm:$0x1]
          %v690 = vadd.f32 %v687, %v689
          %v691 = vmax.f32 %v690, 0.0
          %s692 = scalar_lea.vmem [#allocation3], %s685
          %v693 = vld [vmem:[%s692] sm:$0x1]
          %v694 = vadd.f32 %v693, %v691
          %695 = vst [vmem:[%s692] sm:$0x1] %v694
          %s696 = sadd.s32 %s631, 5
          %s697 = sld [smem:[#allocation5 + %s696]]
          %s698 = sld [smem:[#allocation6 + %s696]]
          %s699 = scalar_lea.vmem [#allocation2], %s697
          %v700 = vld [vmem:[%s699] sm:$0x1]
          %s701 = scalar_lea.vmem %s452, %s696 [#allocation10]
          %v702 = vld [vmem:[%s701] sm:$0x1]
          %v703 = vadd.f32 %v700, %v702
          %v704 = vmax.f32 %v703, 0.0
          %s705 = scalar_lea.vmem [#allocation3], %s698
          %v706 = vld [vmem:[%s705] sm:$0x1]
          %v707 = vadd.f32 %v706, %v704
          %708 = vst [vmem:[%s705] sm:$0x1] %v707
          %s709 = sadd.s32 %s631, 6
          %s710 = sld [smem:[#allocation5 + %s709]]
          %s711 = sld [smem:[#allocation6 + %s709]]
          %s712 = scalar_lea.vmem [#allocation2], %s710
          %v713 = vld [vmem:[%s712] sm:$0x1]
          %s714 = scalar_lea.vmem %s452, %s709 [#allocation10]
          %v715 = vld [vmem:[%s714] sm:$0x1]
          %v716 = vadd.f32 %v713, %v715
          %v717 = vmax.f32 %v716, 0.0
          %s718 = scalar_lea.vmem [#allocation3], %s711
          %v719 = vld [vmem:[%s718] sm:$0x1]
          %v720 = vadd.f32 %v719, %v717
          %721 = vst [vmem:[%s718] sm:$0x1] %v720
          %s722 = sadd.s32 %s631, 7
          %s723 = sld [smem:[#allocation5 + %s722]]
          %s724 = sld [smem:[#allocation6 + %s722]]
          %s725 = scalar_lea.vmem [#allocation2], %s723
          %v726 = vld [vmem:[%s725] sm:$0x1]
          %s727 = scalar_lea.vmem %s452, %s722 [#allocation10]
          %v728 = vld [vmem:[%s727] sm:$0x1]
          %v729 = vadd.f32 %v726, %v728
          %v730 = vmax.f32 %v729, 0.0
          %s731 = scalar_lea.vmem [#allocation3], %s724
          %v732 = vld [vmem:[%s731] sm:$0x1]
          %v733 = vadd.f32 %v732, %v730
          %734 = vst [vmem:[%s731] sm:$0x1] %v733
        $region93: #{tpu_custom_call.1} parent=55 // loop_footer
          %s630 = sadd.s32 1, %s626
        $region94: #{tpu_custom_call.1} parent=55 // loop_footer_branch
          %625 = sbr.rel target = $region90
        $region95: #{tpu_custom_call.1} parent=55 // loop_exit
          _
        %v735 = vld [vmem:[#allocation3] sm:$0xff]
        %v736 = vld [vmem:[#allocation3 + $0x8] sm:$0xff]
        %v737 = vld [vmem:[#allocation3 + $0x10] sm:$0xff]
        %v738 = vld [vmem:[#allocation3 + $0x18] sm:$0xff]
        %v739 = vld [vmem:[#allocation3 + $0x20] sm:$0xff]
        %v740 = vld [vmem:[#allocation3 + $0x28] sm:$0xff]
        %v741 = vld [vmem:[#allocation3 + $0x30] sm:$0xff]
        %v742 = vld [vmem:[#allocation3 + $0x38] sm:$0xff]
        %v743 = vld [vmem:[#allocation3 + $0x40] sm:$0xff]
        %v744 = vld [vmem:[#allocation3 + $0x48] sm:$0xff]
        %v745 = vld [vmem:[#allocation3 + $0x50] sm:$0xff]
        %v746 = vld [vmem:[#allocation3 + $0x58] sm:$0xff]
        %v747 = vld [vmem:[#allocation3 + $0x60] sm:$0xff]
        %v748 = vld [vmem:[#allocation3 + $0x68] sm:$0xff]
        %v749 = vld [vmem:[#allocation3 + $0x70] sm:$0xff]
        %v750 = vld [vmem:[#allocation3 + $0x78] sm:$0xff]
        %v751 = vpack.c.bf16 %v736, %v735
        %v752 = vpack.c.bf16 %v738, %v737
        %v753 = vpack.c.bf16 %v740, %v739
        %v754 = vpack.c.bf16 %v742, %v741
        %v755 = vpack.c.bf16 %v744, %v743
        %v756 = vpack.c.bf16 %v746, %v745
        %v757 = vpack.c.bf16 %v748, %v747
        %v758 = vpack.c.bf16 %v750, %v749
        %v759 = vld [vmem:[%s461] sm:$0xff]
        %v760 = vld [vmem:[%s461 + $0x8] sm:$0xff]
        %v761 = vld [vmem:[%s461 + $0x10] sm:$0xff]
        %v762 = vld [vmem:[%s461 + $0x18] sm:$0xff]
        %v763 = vld [vmem:[%s461 + $0x20] sm:$0xff]
        %v764 = vld [vmem:[%s461 + $0x28] sm:$0xff]
        %v765 = vld [vmem:[%s461 + $0x30] sm:$0xff]
        %v766 = vld [vmem:[%s461 + $0x38] sm:$0xff]
        %v767 = vld [vmem:[%s461 + $0x40] sm:$0xff]
        %v768 = vld [vmem:[%s461 + $0x48] sm:$0xff]
        %v769 = vld [vmem:[%s461 + $0x50] sm:$0xff]
        %v770 = vld [vmem:[%s461 + $0x58] sm:$0xff]
        %v771 = vld [vmem:[%s461 + $0x60] sm:$0xff]
        %v772 = vld [vmem:[%s461 + $0x68] sm:$0xff]
        %v773 = vld [vmem:[%s461 + $0x70] sm:$0xff]
        %v774 = vld [vmem:[%s461 + $0x78] sm:$0xff]
        %v791 = vunpack.c.l.b16 %v759
        %v792 = vunpack.c.h.b16 %v759
        %v793 = vunpack.c.l.b16 %v760
        %v794 = vunpack.c.h.b16 %v760
        %v795 = vunpack.c.l.b16 %v761
        %v796 = vunpack.c.h.b16 %v761
        %v797 = vunpack.c.l.b16 %v762
        %v798 = vunpack.c.h.b16 %v762
        %v799 = vunpack.c.l.b16 %v763
        %v800 = vunpack.c.h.b16 %v763
        %v801 = vunpack.c.l.b16 %v764
        %v802 = vunpack.c.h.b16 %v764
        %v803 = vunpack.c.l.b16 %v765
        %v804 = vunpack.c.h.b16 %v765
        %v805 = vunpack.c.l.b16 %v766
        %v806 = vunpack.c.h.b16 %v766
        %v807 = vunpack.c.l.b16 %v767
        %v808 = vunpack.c.h.b16 %v767
        %v809 = vunpack.c.l.b16 %v768
        %v810 = vunpack.c.h.b16 %v768
        %v811 = vunpack.c.l.b16 %v769
        %v812 = vunpack.c.h.b16 %v769
        %v813 = vunpack.c.l.b16 %v770
        %v814 = vunpack.c.h.b16 %v770
        %v815 = vunpack.c.l.b16 %v771
        %v816 = vunpack.c.h.b16 %v771
        %v817 = vunpack.c.l.b16 %v772
        %v818 = vunpack.c.h.b16 %v772
        %v819 = vunpack.c.l.b16 %v773
        %v820 = vunpack.c.h.b16 %v773
        %v821 = vunpack.c.l.b16 %v774
        %v822 = vunpack.c.h.b16 %v774
        %v823 = vpack.c.b16 %v793, %v791
        %v824 = vpack.c.b16 %v794, %v792
        %v825 = vpack.c.b16 %v797, %v795
        %v826 = vpack.c.b16 %v798, %v796
        %v827 = vpack.c.b16 %v801, %v799
        %v828 = vpack.c.b16 %v802, %v800
        %v829 = vpack.c.b16 %v805, %v803
        %v830 = vpack.c.b16 %v806, %v804
        %v831 = vpack.c.b16 %v809, %v807
        %v832 = vpack.c.b16 %v810, %v808
        %v833 = vpack.c.b16 %v813, %v811
        %v834 = vpack.c.b16 %v814, %v812
        %v835 = vpack.c.b16 %v817, %v815
        %v836 = vpack.c.b16 %v818, %v816
        %v837 = vpack.c.b16 %v821, %v819
        %v838 = vpack.c.b16 %v822, %v820
        %855 = vmatprep.subr.bf16.mxu0 %v838
        %856 = vmatpush1.bf16.msra.mxu0 %v837
        %857 = vmatprep.subr.bf16.mxu0 %v836
        %858 = vmatpush1.bf16.msra.mxu0 %v835
        %859 = vmatprep.subr.bf16.mxu0 %v834
        %860 = vmatpush1.bf16.msra.mxu0 %v833
        %861 = vmatprep.subr.bf16.mxu0 %v832
        %862 = vmatpush1.bf16.msra.mxu0 %v831
        %863 = vmatprep.subr.bf16.mxu0 %v830
        %864 = vmatpush1.bf16.msra.mxu0 %v829
        %865 = vmatprep.subr.bf16.mxu0 %v828
        %866 = vmatpush1.bf16.msra.mxu0 %v827
        %867 = vmatprep.subr.bf16.mxu0 %v826
        %868 = vmatpush1.bf16.msra.mxu0 %v825
        %869 = vmatprep.subr.bf16.mxu0 %v824
        %870 = vmatpush1.bf16.msra.mxu0 %v823
        %871 = vmatprep.subr.bf16.mxu0 0
        %872 = vmatpush2.bf16.msra.mxu0 0
        %873 = vmatprep.subr.bf16.mxu0 0
        %874 = vmatpush2.bf16.msra.mxu0 0
        %875 = vmatprep.subr.bf16.mxu0 0
        %876 = vmatpush2.bf16.msra.mxu0 0
        %877 = vmatprep.subr.bf16.mxu0 0
        %878 = vmatpush2.bf16.msra.mxu0 0
        %879 = vmatprep.subr.bf16.mxu0 0
        %880 = vmatpush2.bf16.msra.mxu0 0
        %881 = vmatprep.subr.bf16.mxu0 0
        %882 = vmatpush2.bf16.msra.mxu0 0
        %883 = vmatprep.subr.bf16.mxu0 0
        %884 = vmatpush2.bf16.msra.mxu0 0
        %885 = vmatprep.subr.bf16.mxu0 0
        %886 = vmatpush2.bf16.msra.mxu0 0
        %887 = vmatprep.mubr.bf16.mxu0 0
        %888 = vmatmul.mubr.bf16.gmra.mxu0 %v751
        %v889 = vpop.f32.mrf.mxu0
        %v890 = vadd.f32 0.0, %v889
        %v891 = vpop.f32.mrf.mxu0
        %v892 = vadd.f32 0.0, %v891
        %v893 = vpop.f32.mrf.mxu0
        %v894 = vadd.f32 0.0, %v893
        %v895 = vpop.f32.mrf.mxu0
        %v896 = vadd.f32 0.0, %v895
        %897 = vmatprep.mubr.bf16.mxu0 0
        %898 = vmatmul.mubr.bf16.gmra.mxu0 %v752
        %v899 = vpop.f32.mrf.mxu0
        %v900 = vadd.f32 0.0, %v899
        %v901 = vpop.f32.mrf.mxu0
        %v902 = vadd.f32 0.0, %v901
        %v903 = vpop.f32.mrf.mxu0
        %v904 = vadd.f32 0.0, %v903
        %v905 = vpop.f32.mrf.mxu0
        %v906 = vadd.f32 0.0, %v905
        %907 = vmatprep.mubr.bf16.mxu0 0
        %908 = vmatmul.mubr.bf16.gmra.mxu0 %v753
        %v909 = vpop.f32.mrf.mxu0
        %v910 = vadd.f32 0.0, %v909
        %v911 = vpop.f32.mrf.mxu0
        %v912 = vadd.f32 0.0, %v911
        %v913 = vpop.f32.mrf.mxu0
        %v914 = vadd.f32 0.0, %v913
        %v915 = vpop.f32.mrf.mxu0
        %v916 = vadd.f32 0.0, %v915
        %917 = vmatprep.mubr.bf16.mxu0 0
        %918 = vmatmul.mubr.bf16.gmra.mxu0 %v754
        %v919 = vpop.f32.mrf.mxu0
        %v920 = vadd.f32 0.0, %v919
        %v921 = vpop.f32.mrf.mxu0
        %v922 = vadd.f32 0.0, %v921
        %v923 = vpop.f32.mrf.mxu0
        %v924 = vadd.f32 0.0, %v923
        %v925 = vpop.f32.mrf.mxu0
        %v926 = vadd.f32 0.0, %v925
        %927 = vmatprep.mubr.bf16.mxu0 0
        %928 = vmatmul.mubr.bf16.gmra.mxu0 %v755
        %v929 = vpop.f32.mrf.mxu0
        %v930 = vadd.f32 0.0, %v929
        %v931 = vpop.f32.mrf.mxu0
        %v932 = vadd.f32 0.0, %v931
        %v933 = vpop.f32.mrf.mxu0
        %v934 = vadd.f32 0.0, %v933
        %v935 = vpop.f32.mrf.mxu0
        %v936 = vadd.f32 0.0, %v935
        %937 = vmatprep.mubr.bf16.mxu0 0
        %938 = vmatmul.mubr.bf16.gmra.mxu0 %v756
        %v939 = vpop.f32.mrf.mxu0
        %v940 = vadd.f32 0.0, %v939
        %v941 = vpop.f32.mrf.mxu0
        %v942 = vadd.f32 0.0, %v941
        %v943 = vpop.f32.mrf.mxu0
        %v944 = vadd.f32 0.0, %v943
        %v945 = vpop.f32.mrf.mxu0
        %v946 = vadd.f32 0.0, %v945
        %947 = vmatprep.mubr.bf16.mxu0 0
        %948 = vmatmul.mubr.bf16.gmra.mxu0 %v757
        %v949 = vpop.f32.mrf.mxu0
        %v950 = vadd.f32 0.0, %v949
        %v951 = vpop.f32.mrf.mxu0
        %v952 = vadd.f32 0.0, %v951
        %v953 = vpop.f32.mrf.mxu0
        %v954 = vadd.f32 0.0, %v953
        %v955 = vpop.f32.mrf.mxu0
        %v956 = vadd.f32 0.0, %v955
        %957 = vmatprep.mubr.bf16.mxu0 0
        %958 = vmatmul.mubr.bf16.gmra.mxu0 %v758
        %v959 = vpop.f32.mrf.mxu0
        %v960 = vadd.f32 0.0, %v959
        %v961 = vpop.f32.mrf.mxu0
        %v962 = vadd.f32 0.0, %v961
        %v963 = vpop.f32.mrf.mxu0
        %v964 = vadd.f32 0.0, %v963
        %v965 = vpop.f32.mrf.mxu0
        %v966 = vadd.f32 0.0, %v965
        %967 = vdwg.mxu0
        %v968 = vld [vmem:[%s555] sm:$0x3]
        %v970 = vlaneseq
        %v971 = vshrl.u32 %v970, 7
        %v972 = vsub.s32 0, %v971
        %v973 = vrot.slane %v968, %v972
        %v974 = vlaneseq
        %v975 = vshrl.u32 %v974, 7
        %v976 = vsub.s32 1, %v975
        %v977 = vrot.slane %v968, %v976
        %v980 = vmul.f32 %v890, %v973
        %v981 = vmul.f32 %v892, %v977
        %v982 = vmul.f32 %v894, %v973
        %v983 = vmul.f32 %v896, %v977
        %v984 = vmul.f32 %v900, %v973
        %v985 = vmul.f32 %v902, %v977
        %v986 = vmul.f32 %v904, %v973
        %v987 = vmul.f32 %v906, %v977
        %v988 = vmul.f32 %v910, %v973
        %v989 = vmul.f32 %v912, %v977
        %v990 = vmul.f32 %v914, %v973
        %v991 = vmul.f32 %v916, %v977
        %v992 = vmul.f32 %v920, %v973
        %v993 = vmul.f32 %v922, %v977
        %v994 = vmul.f32 %v924, %v973
        %v995 = vmul.f32 %v926, %v977
        %v996 = vmul.f32 %v930, %v973
        %v997 = vmul.f32 %v932, %v977
        %v998 = vmul.f32 %v934, %v973
        %v999 = vmul.f32 %v936, %v977
        %v1000 = vmul.f32 %v940, %v973
        %v1001 = vmul.f32 %v942, %v977
        %v1002 = vmul.f32 %v944, %v973
        %v1003 = vmul.f32 %v946, %v977
        %v1004 = vmul.f32 %v950, %v973
        %v1005 = vmul.f32 %v952, %v977
        %v1006 = vmul.f32 %v954, %v973
        %v1007 = vmul.f32 %v956, %v977
        %v1008 = vmul.f32 %v960, %v973
        %v1009 = vmul.f32 %v962, %v977
        %v1010 = vmul.f32 %v964, %v973
        %v1011 = vmul.f32 %v966, %v977
        %v1012 = vld [vmem:[%s470] sm:$0x3]
        %v1014 = vlaneseq
        %v1015 = vshrl.u32 %v1014, 7
        %v1016 = vsub.s32 0, %v1015
        %v1017 = vrot.slane %v1012, %v1016
        %v1018 = vlaneseq
        %v1019 = vshrl.u32 %v1018, 7
        %v1020 = vsub.s32 1, %v1019
        %v1021 = vrot.slane %v1012, %v1020
        %v1024 = vadd.f32 %v980, %v1017
        %v1025 = vadd.f32 %v981, %v1021
        %v1026 = vadd.f32 %v982, %v1017
        %v1027 = vadd.f32 %v983, %v1021
        %v1028 = vadd.f32 %v984, %v1017
        %v1029 = vadd.f32 %v985, %v1021
        %v1030 = vadd.f32 %v986, %v1017
        %v1031 = vadd.f32 %v987, %v1021
        %v1032 = vadd.f32 %v988, %v1017
        %v1033 = vadd.f32 %v989, %v1021
        %v1034 = vadd.f32 %v990, %v1017
        %v1035 = vadd.f32 %v991, %v1021
        %v1036 = vadd.f32 %v992, %v1017
        %v1037 = vadd.f32 %v993, %v1021
        %v1038 = vadd.f32 %v994, %v1017
        %v1039 = vadd.f32 %v995, %v1021
        %v1040 = vadd.f32 %v996, %v1017
        %v1041 = vadd.f32 %v997, %v1021
        %v1042 = vadd.f32 %v998, %v1017
        %v1043 = vadd.f32 %v999, %v1021
        %v1044 = vadd.f32 %v1000, %v1017
        %v1045 = vadd.f32 %v1001, %v1021
        %v1046 = vadd.f32 %v1002, %v1017
        %v1047 = vadd.f32 %v1003, %v1021
        %v1048 = vadd.f32 %v1004, %v1017
        %v1049 = vadd.f32 %v1005, %v1021
        %v1050 = vadd.f32 %v1006, %v1017
        %v1051 = vadd.f32 %v1007, %v1021
        %v1052 = vadd.f32 %v1008, %v1017
        %v1053 = vadd.f32 %v1009, %v1021
        %v1054 = vadd.f32 %v1010, %v1017
        %v1055 = vadd.f32 %v1011, %v1021
        %v1056 = vmax.f32 %v1024, 0.0
        %v1057 = vmax.f32 %v1025, 0.0
        %v1058 = vmax.f32 %v1026, 0.0
        %v1059 = vmax.f32 %v1027, 0.0
        %v1060 = vmax.f32 %v1028, 0.0
        %v1061 = vmax.f32 %v1029, 0.0
        %v1062 = vmax.f32 %v1030, 0.0
        %v1063 = vmax.f32 %v1031, 0.0
        %v1064 = vmax.f32 %v1032, 0.0
        %v1065 = vmax.f32 %v1033, 0.0
        %v1066 = vmax.f32 %v1034, 0.0
        %v1067 = vmax.f32 %v1035, 0.0
        %v1068 = vmax.f32 %v1036, 0.0
        %v1069 = vmax.f32 %v1037, 0.0
        %v1070 = vmax.f32 %v1038, 0.0
        %v1071 = vmax.f32 %v1039, 0.0
        %v1072 = vmax.f32 %v1040, 0.0
        %v1073 = vmax.f32 %v1041, 0.0
        %v1074 = vmax.f32 %v1042, 0.0
        %v1075 = vmax.f32 %v1043, 0.0
        %v1076 = vmax.f32 %v1044, 0.0
        %v1077 = vmax.f32 %v1045, 0.0
        %v1078 = vmax.f32 %v1046, 0.0
        %v1079 = vmax.f32 %v1047, 0.0
        %v1080 = vmax.f32 %v1048, 0.0
        %v1081 = vmax.f32 %v1049, 0.0
        %v1082 = vmax.f32 %v1050, 0.0
        %v1083 = vmax.f32 %v1051, 0.0
        %v1084 = vmax.f32 %v1052, 0.0
        %v1085 = vmax.f32 %v1053, 0.0
        %v1086 = vmax.f32 %v1054, 0.0
        %v1087 = vmax.f32 %v1055, 0.0
        %v1088 = vpack.c.bf16 %v1058, %v1056
        %v1089 = vpack.c.bf16 %v1059, %v1057
        %v1090 = vpack.c.bf16 %v1062, %v1060
        %v1091 = vpack.c.bf16 %v1063, %v1061
        %v1092 = vpack.c.bf16 %v1066, %v1064
        %v1093 = vpack.c.bf16 %v1067, %v1065
        %v1094 = vpack.c.bf16 %v1070, %v1068
        %v1095 = vpack.c.bf16 %v1071, %v1069
        %v1096 = vpack.c.bf16 %v1074, %v1072
        %v1097 = vpack.c.bf16 %v1075, %v1073
        %v1098 = vpack.c.bf16 %v1078, %v1076
        %v1099 = vpack.c.bf16 %v1079, %v1077
        %v1100 = vpack.c.bf16 %v1082, %v1080
        %v1101 = vpack.c.bf16 %v1083, %v1081
        %v1102 = vpack.c.bf16 %v1086, %v1084
        %v1103 = vpack.c.bf16 %v1087, %v1085
        %v1104 = vld [vmem:[%s479] sm:$0xf]
        %v1105 = vld [vmem:[%s479 + $0x4] sm:$0xf]
        %v1106 = vld [vmem:[%s479 + $0x8] sm:$0xf]
        %v1107 = vld [vmem:[%s479 + $0xc] sm:$0xf]
        %v1108 = vld [vmem:[%s479 + $0x10] sm:$0xf]
        %v1109 = vld [vmem:[%s479 + $0x14] sm:$0xf]
        %v1110 = vld [vmem:[%s479 + $0x18] sm:$0xf]
        %v1111 = vld [vmem:[%s479 + $0x1c] sm:$0xf]
        %v1112 = vld [vmem:[%s479 + $0x20] sm:$0xf]
        %v1113 = vld [vmem:[%s479 + $0x24] sm:$0xf]
        %v1114 = vld [vmem:[%s479 + $0x28] sm:$0xf]
        %v1115 = vld [vmem:[%s479 + $0x2c] sm:$0xf]
        %v1116 = vld [vmem:[%s479 + $0x30] sm:$0xf]
        %v1117 = vld [vmem:[%s479 + $0x34] sm:$0xf]
        %v1118 = vld [vmem:[%s479 + $0x38] sm:$0xf]
        %v1119 = vld [vmem:[%s479 + $0x3c] sm:$0xf]
        %v1120 = vld [vmem:[%s479 + $0x40] sm:$0xf]
        %v1121 = vld [vmem:[%s479 + $0x44] sm:$0xf]
        %v1122 = vld [vmem:[%s479 + $0x48] sm:$0xf]
        %v1123 = vld [vmem:[%s479 + $0x4c] sm:$0xf]
        %v1124 = vld [vmem:[%s479 + $0x50] sm:$0xf]
        %v1125 = vld [vmem:[%s479 + $0x54] sm:$0xf]
        %v1126 = vld [vmem:[%s479 + $0x58] sm:$0xf]
        %v1127 = vld [vmem:[%s479 + $0x5c] sm:$0xf]
        %v1128 = vld [vmem:[%s479 + $0x60] sm:$0xf]
        %v1129 = vld [vmem:[%s479 + $0x64] sm:$0xf]
        %v1130 = vld [vmem:[%s479 + $0x68] sm:$0xf]
        %v1131 = vld [vmem:[%s479 + $0x6c] sm:$0xf]
        %v1132 = vld [vmem:[%s479 + $0x70] sm:$0xf]
        %v1133 = vld [vmem:[%s479 + $0x74] sm:$0xf]
        %v1134 = vld [vmem:[%s479 + $0x78] sm:$0xf]
        %v1135 = vld [vmem:[%s479 + $0x7c] sm:$0xf]
        %v1168 = vunpack.c.l.b16 %v1104
        %v1169 = vunpack.c.l.b16 %v1105
        %v1170 = vunpack.c.l.b16 %v1106
        %v1171 = vunpack.c.l.b16 %v1107
        %v1172 = vunpack.c.l.b16 %v1108
        %v1173 = vunpack.c.l.b16 %v1109
        %v1174 = vunpack.c.l.b16 %v1110
        %v1175 = vunpack.c.l.b16 %v1111
        %v1176 = vunpack.c.l.b16 %v1112
        %v1177 = vunpack.c.l.b16 %v1113
        %v1178 = vunpack.c.l.b16 %v1114
        %v1179 = vunpack.c.l.b16 %v1115
        %v1180 = vunpack.c.l.b16 %v1116
        %v1181 = vunpack.c.l.b16 %v1117
        %v1182 = vunpack.c.l.b16 %v1118
        %v1183 = vunpack.c.l.b16 %v1119
        %v1184 = vunpack.c.l.b16 %v1120
        %v1185 = vunpack.c.l.b16 %v1121
        %v1186 = vunpack.c.l.b16 %v1122
        %v1187 = vunpack.c.l.b16 %v1123
        %v1188 = vunpack.c.l.b16 %v1124
        %v1189 = vunpack.c.l.b16 %v1125
        %v1190 = vunpack.c.l.b16 %v1126
        %v1191 = vunpack.c.l.b16 %v1127
        %v1192 = vunpack.c.l.b16 %v1128
        %v1193 = vunpack.c.l.b16 %v1129
        %v1194 = vunpack.c.l.b16 %v1130
        %v1195 = vunpack.c.l.b16 %v1131
        %v1196 = vunpack.c.l.b16 %v1132
        %v1197 = vunpack.c.l.b16 %v1133
        %v1198 = vunpack.c.l.b16 %v1134
        %v1199 = vunpack.c.l.b16 %v1135
        %v1200 = vpack.c.b16 %v1169, %v1168
        %v1201 = vpack.c.b16 %v1171, %v1170
        %v1202 = vpack.c.b16 %v1173, %v1172
        %v1203 = vpack.c.b16 %v1175, %v1174
        %v1204 = vpack.c.b16 %v1177, %v1176
        %v1205 = vpack.c.b16 %v1179, %v1178
        %v1206 = vpack.c.b16 %v1181, %v1180
        %v1207 = vpack.c.b16 %v1183, %v1182
        %v1208 = vpack.c.b16 %v1185, %v1184
        %v1209 = vpack.c.b16 %v1187, %v1186
        %v1210 = vpack.c.b16 %v1189, %v1188
        %v1211 = vpack.c.b16 %v1191, %v1190
        %v1212 = vpack.c.b16 %v1193, %v1192
        %v1213 = vpack.c.b16 %v1195, %v1194
        %v1214 = vpack.c.b16 %v1197, %v1196
        %v1215 = vpack.c.b16 %v1199, %v1198
        %1232 = vmatprep.subr.bf16.mxu0 0
        %1233 = vmatpush1.bf16.msra.mxu0 %v1207
        %1234 = vmatprep.subr.bf16.mxu0 0
        %1235 = vmatpush1.bf16.msra.mxu0 %v1206
        %1236 = vmatprep.subr.bf16.mxu0 0
        %1237 = vmatpush1.bf16.msra.mxu0 %v1205
        %1238 = vmatprep.subr.bf16.mxu0 0
        %1239 = vmatpush1.bf16.msra.mxu0 %v1204
        %1240 = vmatprep.subr.bf16.mxu0 0
        %1241 = vmatpush1.bf16.msra.mxu0 %v1203
        %1242 = vmatprep.subr.bf16.mxu0 0
        %1243 = vmatpush1.bf16.msra.mxu0 %v1202
        %1244 = vmatprep.subr.bf16.mxu0 0
        %1245 = vmatpush1.bf16.msra.mxu0 %v1201
        %1246 = vmatprep.subr.bf16.mxu0 0
        %1247 = vmatpush1.bf16.msra.mxu0 %v1200
        %1248 = vmatprep.subr.bf16.mxu0 0
        %1249 = vmatpush2.bf16.msra.mxu0 %v1215
        %1250 = vmatprep.subr.bf16.mxu0 0
        %1251 = vmatpush2.bf16.msra.mxu0 %v1214
        %1252 = vmatprep.subr.bf16.mxu0 0
        %1253 = vmatpush2.bf16.msra.mxu0 %v1213
        %1254 = vmatprep.subr.bf16.mxu0 0
        %1255 = vmatpush2.bf16.msra.mxu0 %v1212
        %1256 = vmatprep.subr.bf16.mxu0 0
        %1257 = vmatpush2.bf16.msra.mxu0 %v1211
        %1258 = vmatprep.subr.bf16.mxu0 0
        %1259 = vmatpush2.bf16.msra.mxu0 %v1210
        %1260 = vmatprep.subr.bf16.mxu0 0
        %1261 = vmatpush2.bf16.msra.mxu0 %v1209
        %1262 = vmatprep.subr.bf16.mxu0 0
        %1263 = vmatpush2.bf16.msra.mxu0 %v1208
        %1264 = vmatprep.mubr.bf16.mxu0 %v1089
        %1265 = vmatmul.mubr.bf16.gmra.mxu0 %v1088
        %v1266 = vpop.f32.mrf.mxu0
        %v1267 = vadd.f32 0.0, %v1266
        %v1268 = vpop.f32.mrf.mxu0
        %v1269 = vpop.f32.mrf.mxu0
        %v1270 = vadd.f32 0.0, %v1269
        %v1271 = vpop.f32.mrf.mxu0
        %1272 = vmatprep.mubr.bf16.mxu0 %v1091
        %1273 = vmatmul.mubr.bf16.gmra.mxu0 %v1090
        %v1274 = vpop.f32.mrf.mxu0
        %v1275 = vadd.f32 0.0, %v1274
        %v1276 = vpop.f32.mrf.mxu0
        %v1277 = vpop.f32.mrf.mxu0
        %v1278 = vadd.f32 0.0, %v1277
        %v1279 = vpop.f32.mrf.mxu0
        %1280 = vmatprep.mubr.bf16.mxu0 %v1093
        %1281 = vmatmul.mubr.bf16.gmra.mxu0 %v1092
        %v1282 = vpop.f32.mrf.mxu0
        %v1283 = vadd.f32 0.0, %v1282
        %v1284 = vpop.f32.mrf.mxu0
        %v1285 = vpop.f32.mrf.mxu0
        %v1286 = vadd.f32 0.0, %v1285
        %v1287 = vpop.f32.mrf.mxu0
        %1288 = vmatprep.mubr.bf16.mxu0 %v1095
        %1289 = vmatmul.mubr.bf16.gmra.mxu0 %v1094
        %v1290 = vpop.f32.mrf.mxu0
        %v1291 = vadd.f32 0.0, %v1290
        %v1292 = vpop.f32.mrf.mxu0
        %v1293 = vpop.f32.mrf.mxu0
        %v1294 = vadd.f32 0.0, %v1293
        %v1295 = vpop.f32.mrf.mxu0
        %1296 = vmatprep.mubr.bf16.mxu0 %v1097
        %1297 = vmatmul.mubr.bf16.gmra.mxu0 %v1096
        %v1298 = vpop.f32.mrf.mxu0
        %v1299 = vadd.f32 0.0, %v1298
        %v1300 = vpop.f32.mrf.mxu0
        %v1301 = vpop.f32.mrf.mxu0
        %v1302 = vadd.f32 0.0, %v1301
        %v1303 = vpop.f32.mrf.mxu0
        %1304 = vmatprep.mubr.bf16.mxu0 %v1099
        %1305 = vmatmul.mubr.bf16.gmra.mxu0 %v1098
        %v1306 = vpop.f32.mrf.mxu0
        %v1307 = vadd.f32 0.0, %v1306
        %v1308 = vpop.f32.mrf.mxu0
        %v1309 = vpop.f32.mrf.mxu0
        %v1310 = vadd.f32 0.0, %v1309
        %v1311 = vpop.f32.mrf.mxu0
        %1312 = vmatprep.mubr.bf16.mxu0 %v1101
        %1313 = vmatmul.mubr.bf16.gmra.mxu0 %v1100
        %v1314 = vpop.f32.mrf.mxu0
        %v1315 = vadd.f32 0.0, %v1314
        %v1316 = vpop.f32.mrf.mxu0
        %v1317 = vpop.f32.mrf.mxu0
        %v1318 = vadd.f32 0.0, %v1317
        %v1319 = vpop.f32.mrf.mxu0
        %1320 = vmatprep.mubr.bf16.mxu0 %v1103
        %1321 = vmatmul.mubr.bf16.gmra.mxu0 %v1102
        %v1322 = vpop.f32.mrf.mxu0
        %v1323 = vadd.f32 0.0, %v1322
        %v1324 = vpop.f32.mrf.mxu0
        %v1325 = vpop.f32.mrf.mxu0
        %v1326 = vadd.f32 0.0, %v1325
        %v1327 = vpop.f32.mrf.mxu0
        %1328 = vdwg.mxu0
        %v1329 = vld [vmem:[%s487] sm:$0x1]
        %v1331 = vlaneseq
        %v1332 = vshrl.u32 %v1331, 7
        %v1333 = vsub.s32 0, %v1332
        %v1334 = vrot.slane %v1329, %v1333
        %v1336 = vmul.f32 %v1267, %v1334
        %v1337 = vmul.f32 %v1270, %v1334
        %v1338 = vmul.f32 %v1275, %v1334
        %v1339 = vmul.f32 %v1278, %v1334
        %v1340 = vmul.f32 %v1283, %v1334
        %v1341 = vmul.f32 %v1286, %v1334
        %v1342 = vmul.f32 %v1291, %v1334
        %v1343 = vmul.f32 %v1294, %v1334
        %v1344 = vmul.f32 %v1299, %v1334
        %v1345 = vmul.f32 %v1302, %v1334
        %v1346 = vmul.f32 %v1307, %v1334
        %v1347 = vmul.f32 %v1310, %v1334
        %v1348 = vmul.f32 %v1315, %v1334
        %v1349 = vmul.f32 %v1318, %v1334
        %v1350 = vmul.f32 %v1323, %v1334
        %v1351 = vmul.f32 %v1326, %v1334
        %v1352 = vld [vmem:[%s495] sm:$0x1]
        %v1354 = vlaneseq
        %v1355 = vshrl.u32 %v1354, 7
        %v1356 = vsub.s32 0, %v1355
        %v1357 = vrot.slane %v1352, %v1356
        %v1359 = vadd.f32 %v1336, %v1357
        %v1360 = vadd.f32 %v1337, %v1357
        %v1361 = vadd.f32 %v1338, %v1357
        %v1362 = vadd.f32 %v1339, %v1357
        %v1363 = vadd.f32 %v1340, %v1357
        %v1364 = vadd.f32 %v1341, %v1357
        %v1365 = vadd.f32 %v1342, %v1357
        %v1366 = vadd.f32 %v1343, %v1357
        %v1367 = vadd.f32 %v1344, %v1357
        %v1368 = vadd.f32 %v1345, %v1357
        %v1369 = vadd.f32 %v1346, %v1357
        %v1370 = vadd.f32 %v1347, %v1357
        %v1371 = vadd.f32 %v1348, %v1357
        %v1372 = vadd.f32 %v1349, %v1357
        %v1373 = vadd.f32 %v1350, %v1357
        %v1374 = vadd.f32 %v1351, %v1357
        %p1375 = scmp.lt.s32.totalorder %s39, 2
        // Predicated region
        $region96: #{tpu_custom_call.1} parent=55 // pred_check
          %p1376 = pneg %p1375
        $region97: #{tpu_custom_call.1} parent=55 // pred_check_branch
          %1378 = sbr.rel (%p1376) target = $region99
        $region98: #{tpu_custom_call.1} parent=55 // pred_region
          %v1379 = vmax.f32 %v1359, 0.0
          %v1380 = vmax.f32 %v1360, 0.0
          %v1381 = vmax.f32 %v1361, 0.0
          %v1382 = vmax.f32 %v1362, 0.0
          %v1383 = vmax.f32 %v1363, 0.0
          %v1384 = vmax.f32 %v1364, 0.0
          %v1385 = vmax.f32 %v1365, 0.0
          %v1386 = vmax.f32 %v1366, 0.0
          %v1387 = vmax.f32 %v1367, 0.0
          %v1388 = vmax.f32 %v1368, 0.0
          %v1389 = vmax.f32 %v1369, 0.0
          %v1390 = vmax.f32 %v1370, 0.0
          %v1391 = vmax.f32 %v1371, 0.0
          %v1392 = vmax.f32 %v1372, 0.0
          %v1393 = vmax.f32 %v1373, 0.0
          %v1394 = vmax.f32 %v1374, 0.0
          %1395 = vst [vmem:[#allocation2] sm:$0xff] %v1379
          %1396 = vst [vmem:[#allocation2 + $0x8] sm:$0xff] %v1380
          %1397 = vst [vmem:[#allocation2 + $0x10] sm:$0xff] %v1381
          %1398 = vst [vmem:[#allocation2 + $0x18] sm:$0xff] %v1382
          %1399 = vst [vmem:[#allocation2 + $0x20] sm:$0xff] %v1383
          %1400 = vst [vmem:[#allocation2 + $0x28] sm:$0xff] %v1384
          %1401 = vst [vmem:[#allocation2 + $0x30] sm:$0xff] %v1385
          %1402 = vst [vmem:[#allocation2 + $0x38] sm:$0xff] %v1386
          %1403 = vst [vmem:[#allocation2 + $0x40] sm:$0xff] %v1387
          %1404 = vst [vmem:[#allocation2 + $0x48] sm:$0xff] %v1388
          %1405 = vst [vmem:[#allocation2 + $0x50] sm:$0xff] %v1389
          %1406 = vst [vmem:[#allocation2 + $0x58] sm:$0xff] %v1390
          %1407 = vst [vmem:[#allocation2 + $0x60] sm:$0xff] %v1391
          %1408 = vst [vmem:[#allocation2 + $0x68] sm:$0xff] %v1392
          %1409 = vst [vmem:[#allocation2 + $0x70] sm:$0xff] %v1393
          %1410 = vst [vmem:[#allocation2 + $0x78] sm:$0xff] %v1394
        $region99: #{tpu_custom_call.1} parent=55 // pred_fallthru
          _
        %p1411 = scmp.eq.s32.totalorder %s39, 2
        // Predicated region
        $region100: #{tpu_custom_call.1} parent=55 // pred_check
          %p1412 = pneg %p1411
        $region101: #{tpu_custom_call.1} parent=55 // pred_check_branch
          %1414 = sbr.rel (%p1412) target = $region103
        $region102: #{tpu_custom_call.1} parent=55 // pred_region
          %v1415 = vld [vmem:[%s10] sm:$0xff]
          %1416 = vmatprep.subr.mxu0 0.0
          %1417 = vmatpush1.msra.mxu0 %v1374
          %1418 = vmatprep.subr.mxu0 0.0
          %1419 = vmatpush1.msra.mxu0 %v1373
          %1420 = vmatprep.subr.mxu0 0.0
          %1421 = vmatpush1.msra.mxu0 %v1372
          %1422 = vmatprep.subr.mxu0 0.0
          %1423 = vmatpush1.msra.mxu0 %v1371
          %1424 = vmatprep.subr.mxu0 0.0
          %1425 = vmatpush1.msra.mxu0 %v1370
          %1426 = vmatprep.subr.mxu0 0.0
          %1427 = vmatpush1.msra.mxu0 %v1369
          %1428 = vmatprep.subr.mxu0 0.0
          %1429 = vmatpush1.msra.mxu0 %v1368
          %1430 = vmatprep.subr.mxu0 0.0
          %1431 = vmatpush1.msra.mxu0 %v1367
          %1432 = vmatprep.subr.mxu0 0.0
          %1433 = vmatpush1.msra.mxu0 %v1366
          %1434 = vmatprep.subr.mxu0 0.0
          %1435 = vmatpush1.msra.mxu0 %v1365
          %1436 = vmatprep.subr.mxu0 0.0
          %1437 = vmatpush1.msra.mxu0 %v1364
          %1438 = vmatprep.subr.mxu0 0.0
          %1439 = vmatpush1.msra.mxu0 %v1363
          %1440 = vmatprep.subr.mxu0 0.0
          %1441 = vmatpush1.msra.mxu0 %v1362
          %1442 = vmatprep.subr.mxu0 0.0
          %1443 = vmatpush1.msra.mxu0 %v1361
          %1444 = vmatprep.subr.mxu0 0.0
          %1445 = vmatpush1.msra.mxu0 %v1360
          %1446 = vmatprep.subr.mxu0 0.0
          %1447 = vmatpush1.msra.mxu0 %v1359
          %1448 = vmatprep.subr.mxu0 0.0
          %1449 = vmatpush2.msra.mxu0 0.0
          %1450 = vmatprep.subr.mxu0 0.0
          %1451 = vmatpush2.msra.mxu0 0.0
          %1452 = vmatprep.subr.mxu0 0.0
          %1453 = vmatpush2.msra.mxu0 0.0
          %1454 = vmatprep.subr.mxu0 0.0
          %1455 = vmatpush2.msra.mxu0 0.0
          %1456 = vmatprep.subr.mxu0 0.0
          %1457 = vmatpush2.msra.mxu0 0.0
          %1458 = vmatprep.subr.mxu0 0.0
          %1459 = vmatpush2.msra.mxu0 0.0
          %1460 = vmatprep.subr.mxu0 0.0
          %1461 = vmatpush2.msra.mxu0 0.0
          %1462 = vmatprep.subr.mxu0 0.0
          %1463 = vmatpush2.msra.mxu0 0.0
          %1464 = vmatprep.subr.mxu0 0.0
          %1465 = vmatpush2.msra.mxu0 0.0
          %1466 = vmatprep.subr.mxu0 0.0
          %1467 = vmatpush2.msra.mxu0 0.0
          %1468 = vmatprep.subr.mxu0 0.0
          %1469 = vmatpush2.msra.mxu0 0.0
          %1470 = vmatprep.subr.mxu0 0.0
          %1471 = vmatpush2.msra.mxu0 0.0
          %1472 = vmatprep.subr.mxu0 0.0
          %1473 = vmatpush2.msra.mxu0 0.0
          %1474 = vmatprep.subr.mxu0 0.0
          %1475 = vmatpush2.msra.mxu0 0.0
          %1476 = vmatprep.subr.mxu0 0.0
          %1477 = vmatpush2.msra.mxu0 0.0
          %1478 = vmatprep.subr.mxu0 0.0
          %1479 = vmatpush2.msra.mxu0 0.0
          %1480 = vmatprep.mubr.f32.mxu0 0.0
          %1481 = vmatmul.mubr.f32.gmra.mxu0 %v1415
          %v1482 = vpop.f32.mrf.mxu0
          %v1483 = vadd.f32 0.0, %v1482
          %v1484 = vpop.f32.mrf.mxu0
          %1485 = vdwg.mxu0
          %1486 = vst [vmem:[#allocation19] sm:$0xff] %v1483
        $region103: #{tpu_custom_call.1} parent=55 // pred_fallthru
          _
        // Predicated region
        $region104: #{tpu_custom_call.1} parent=55 // pred_check
          %p1487 = pneg %p276
        $region105: #{tpu_custom_call.1} parent=55 // pred_check_branch
          %1489 = sbr.rel (%p1487) target = $region107
        $region106: #{tpu_custom_call.1} parent=55 // pred_region
          %s1491 = ssub.s32 128, 128
          %1492 = vsyncadd [#allocation9], %s1491
          %s1494 = sshll.u32 [#allocation19], 4
          %s1495 = int_to_ptr.vmem [resolvable:$true] %s1494
          %1497 = dma.vmem_to_hbm [thread:$0]  %s1495, 128, %s11, [#allocation9]
        $region107: #{tpu_custom_call.1} parent=55 // pred_fallthru
          _
        // Predicated region
        $region108: #{tpu_custom_call.1} parent=55 // pred_check
          %p1498 = pneg %p276
        $region109: #{tpu_custom_call.1} parent=55 // pred_check_branch
          %1500 = sbr.rel (%p1498) target = $region111
        $region110: #{tpu_custom_call.1} parent=55 // pred_region
          %1501 = dma.done [#allocation9], 128
        $region111: #{tpu_custom_call.1} parent=55 // pred_fallthru
          _
      $region56: #{tpu_custom_call.1} parent=5 // pred_fallthru
        _
      %p1502 = scmp.le.s32.totalorder 2, %s34
      // Predicated region
      $region112: #{tpu_custom_call.1} parent=5 // pred_check
        %p1503 = pneg %p1502
      $region113: #{tpu_custom_call.1} parent=5 // pred_check_branch
        %1505 = sbr.rel (%p1503) target = $region115
      $region114: #{tpu_custom_call.1} parent=5 // pred_region
        %s1506 = ssub.s32 %s34, 2
      $region115: #{tpu_custom_call.1} parent=5 // pred_fallthru
        _
    $region6: #{tpu_custom_call.1} parent=1 // loop_footer
      %s38 = sadd.s32 1, %s34
    $region7: #{tpu_custom_call.1} parent=1 // loop_footer_branch
      %33 = sbr.rel target = $region3
    $region8: #{tpu_custom_call.1} parent=1 // loop_exit
      _
    %1507 = vsyncpa [#allocation8], 1
    %s1508 = scalar_lea.sflag [#allocation8], 1
    %1509 = vsyncpa %s1508, 1
    %1510 = vsyncpa [#allocation11], 1
    %s1511 = scalar_lea.sflag [#allocation11], 1
    %1512 = vsyncpa %s1511, 1
    %1513 = vsyncpa [#allocation14], 1
    %s1514 = scalar_lea.sflag [#allocation14], 1
    %1515 = vsyncpa %s1514, 1
    %1516 = vsyncpa [#allocation17], 1
    %s1517 = scalar_lea.sflag [#allocation17], 1
    %1518 = vsyncpa %s1517, 1
    %1519 = vsyncpa [#allocation9], 1
    %s1520 = scalar_lea.sflag [#allocation9], 1
    %1521 = vsyncpa %s1520, 1

</llo_original>
